<compile_context>
chip_gen: v7x
topology: tpu7x:2x2x1
jax: 0.10.0
libtpu: 0.0.40
codegen_flags: <defaults>
</compile_context>

<pallas_src>
import numpy as np
import jax
import jax.numpy as jnp
from jax.experimental import pallas as pl
from jax.experimental.pallas import tpu as pltpu


# ----------------------------------------------------------------------------
# Deterministic "parameters" (same constants as the PyTorch module's __init__).
# ----------------------------------------------------------------------------
def quality_to_factor(quality):
    if quality < 50:
        q = 5000.0 / quality
    else:
        q = 200.0 - quality * 2
    return q / 100.0


_Y_TABLE = np.array(
    [[16, 11, 10, 16, 24, 40, 51, 61],
     [12, 12, 14, 19, 26, 58, 60, 55],
     [14, 13, 16, 24, 40, 57, 69, 56],
     [14, 17, 22, 29, 51, 87, 80, 62],
     [18, 22, 37, 56, 68, 109, 103, 77],
     [24, 35, 55, 64, 81, 104, 113, 92],
     [49, 64, 78, 87, 103, 121, 120, 101],
     [72, 92, 95, 98, 112, 100, 103, 99]], dtype=np.float32).T

_C_TABLE = np.full((8, 8), 99, dtype=np.float32)
_C_TABLE[:4, :4] = np.array(
    [[17, 18, 24, 47], [18, 21, 26, 66],
     [24, 26, 56, 99], [47, 66, 99, 99]], dtype=np.float32).T


def _dct_basis():
    # A[x, u] = cos((2x+1) u pi / 16) * alpha[u] / 2
    # per 8x8 block:  DCT  D = A^T X A   (== scale * C^T X C, scale = outer(alpha,alpha)/4)
    #                 IDCT X = A D A^T + 128
    xs = np.arange(8)
    C = np.cos((2 * xs[:, None] + 1) * xs[None, :] * np.pi / 16.0)
    alpha = np.array([1.0 / np.sqrt(2.0)] + [1.0] * 7)
    return (C * (alpha * 0.5)[None, :]).astype(np.float32)


def _block_diag(A, reps):
    n = A.shape[0]
    M = np.zeros((n * reps, n * reps), dtype=np.float32)
    for i in range(reps):
        M[i * n:(i + 1) * n, i * n:(i + 1) * n] = A
    return M


def _pool_matrix(n):
    # (n, n/2): 2x average pooling along one axis
    P = np.zeros((n, n // 2), dtype=np.float32)
    for i in range(n // 2):
        P[2 * i, i] = 0.5
        P[2 * i + 1, i] = 0.5
    return P


def _repeat_matrix(n):
    # (n, n/2): 2x nearest-neighbour upsampling along one axis
    R = np.zeros((n, n // 2), dtype=np.float32)
    for i in range(n // 2):
        R[2 * i, i] = 1.0
        R[2 * i + 1, i] = 1.0
    return R


def _build_constants(H, W, factor):
    A = _dct_basis()
    bh = _block_diag(A, H // 8)            # (H, H)   luma DCT along rows (blockwise)
    bw = _block_diag(A, W // 8)            # (W, W)   luma DCT along cols (blockwise)
    bch = _block_diag(A, H // 16)          # (H/2, H/2) chroma DCT (subsampled plane)
    bcw = _block_diag(A, W // 16)          # (W/2, W/2)
    mfh = _pool_matrix(H) @ bch            # (H, H/2)  fold 2x2 avg-pool into chroma DCT
    mfw = _pool_matrix(W) @ bcw            # (W, W/2)
    mih = _repeat_matrix(H) @ bch          # (H, H/2)  fold nearest-upsample into chroma IDCT
    miw = _repeat_matrix(W) @ bcw          # (W, W/2)
    yq = np.tile(_Y_TABLE * factor, (H // 8, W // 8)).astype(np.float32)       # (H, W)
    cq = np.tile(_C_TABLE * factor, (H // 16, W // 16)).astype(np.float32)     # (H/2, W/2)
    consts = dict(
        bht=bh.T, bw=bw, bh=bh, bwt=bw.T,
        mfht=mfh.T, mfw=mfw, mih=mih, miwt=miw.T,
        yqinv=1.0 / yq, yq=yq, cqinv=1.0 / cq, cq=cq,
    )
    return {k: jnp.asarray(np.ascontiguousarray(v), dtype=jnp.float32)
            for k, v in consts.items()}


# ----------------------------------------------------------------------------
# Fused Pallas kernel: one grid step == one image (3, H, W)
# ----------------------------------------------------------------------------
def diffjpeg_kernel(x_ref, bht_ref, bw_ref, bh_ref, bwt_ref,
                    mfht_ref, mfw_ref, mih_ref, miwt_ref,
                    yqinv_ref, yq_ref, cqinv_ref, cq_ref, o_ref):
    # ---- RGB -> YCbCr (compress_jpeg multiplies by 255 first) ----
    r = x_ref[0] * 255.0
    g = x_ref[1] * 255.0
    b = x_ref[2] * 255.0
    y = 0.299 * r + 0.587 * g + 0.114 * b
    cb = -0.168736 * r - 0.331264 * g + 0.5 * b + 128.0
    cr = 0.5 * r - 0.418688 * g - 0.081312 * b + 128.0

    # ---- Luma: per-8x8 DCT -> quantize -> dequantize -> IDCT via block-diag operators ----
    d = jnp.dot(bht_ref[...], y - 128.0, preferred_element_type=jnp.float32)
    d = jnp.dot(d, bw_ref[...], preferred_element_type=jnp.float32)
    q = jnp.round(d * yqinv_ref[...])          # differentiable_quantize forward == round
    d2 = q * yq_ref[...]
    yr = jnp.dot(bh_ref[...], d2, preferred_element_type=jnp.float32)
    yr = jnp.dot(yr, bwt_ref[...], preferred_element_type=jnp.float32) + 128.0

    # ---- Chroma: (2x2 avg-pool + DCT) / (IDCT + 2x upsample) folded into operators ----
    def chroma(c):
        dd = jnp.dot(mfht_ref[...], c - 128.0, preferred_element_type=jnp.float32)
        dd = jnp.dot(dd, mfw_ref[...], preferred_element_type=jnp.float32)
        qq = jnp.round(dd * cqinv_ref[...])
        dq = qq * cq_ref[...]
        rec = jnp.dot(mih_ref[...], dq, preferred_element_type=jnp.float32)
        return jnp.dot(rec, miwt_ref[...], preferred_element_type=jnp.float32) + 128.0

    cbr = chroma(cb) - 128.0
    crr = chroma(cr) - 128.0

    # ---- YCbCr -> RGB, clamp to [0, 255], /255 ----
    rr = yr + 1.402 * crr
    gg = yr - 0.344136 * cbr - 0.714136 * crr
    bb = yr + 1.772 * cbr
    inv255 = 1.0 / 255.0
    o_ref[0] = jnp.clip(rr, 0.0, 255.0) * inv255
    o_ref[1] = jnp.clip(gg, 0.0, 255.0) * inv255
    o_ref[2] = jnp.clip(bb, 0.0, 255.0) * inv255


def diff_jpeg_forward(x, consts):
    # x: (N, 3, H, W) float32 in [0, 1]
    N, C, H, W = x.shape
    assert C == 3 and H % 16 == 0 and W % 16 == 0
    x3 = x.reshape(N * 3, H, W)     # free reshape (contiguous leading dims)

    c = consts
    args = (x3, c['bht'], c['bw'], c['bh'], c['bwt'],
            c['mfht'], c['mfw'], c['mih'], c['miwt'],
            c['yqinv'], c['yq'], c['cqinv'], c['cq'])

    def full2d(a):
        return pl.BlockSpec(a.shape, lambda n: (0, 0))

    in_specs = [pl.BlockSpec((3, H, W), lambda n: (n, 0, 0))] + [full2d(a) for a in args[1:]]

    out = pl.pallas_call(
        diffjpeg_kernel,
        out_shape=jax.ShapeDtypeStruct((N * 3, H, W), jnp.float32),
        grid=(N,),
        in_specs=in_specs,
        out_specs=pl.BlockSpec((3, H, W), lambda n: (n, 0, 0)),
        compiler_params=pltpu.CompilerParams(dimension_semantics=("parallel",)),
    )(*args)
    return out.reshape(N, 3, H, W)


# ----------------------------------------------------------------------------
if __name__ == "__main__":
    N, C, H, W = 2, 3, 16, 16
    key = jax.random.PRNGKey(0)
    x = jax.random.uniform(key, (N, C, H, W), dtype=jnp.float32)

    # Quality is drawn randomly in the PyTorch module; use a deterministic seeded draw.
    quality, quality_range = 80, 3
    rng = np.random.RandomState(0)
    q = int(rng.randint(quality - quality_range, quality + quality_range + 1))
    factor = float(quality_to_factor(q))

    consts = _build_constants(H, W, factor)

    fwd = jax.jit(lambda img: diff_jpeg_forward(img, consts))
    out = jax.block_until_ready(fwd(x))

    assert out.shape == (N, C, H, W)
    assert out.dtype == jnp.float32
    assert bool(jnp.all(jnp.isfinite(out)))
    assert float(out.min()) >= 0.0 and float(out.max()) <= 1.0
    print("KERNEL_OK")
</pallas_src>

<mosaic_0001>
module attributes {stable_mosaic.version = 11 : i64} {
  func.func @diffjpeg_kernel(%arg0: i32, %arg1: memref<3x16x16xf32, #tpu.memory_space<vmem>>, %arg2: memref<16x16xf32, #tpu.memory_space<vmem>>, %arg3: memref<16x16xf32, #tpu.memory_space<vmem>>, %arg4: memref<16x16xf32, #tpu.memory_space<vmem>>, %arg5: memref<16x16xf32, #tpu.memory_space<vmem>>, %arg6: memref<8x16xf32, #tpu.memory_space<vmem>>, %arg7: memref<16x8xf32, #tpu.memory_space<vmem>>, %arg8: memref<16x8xf32, #tpu.memory_space<vmem>>, %arg9: memref<8x16xf32, #tpu.memory_space<vmem>>, %arg10: memref<16x16xf32, #tpu.memory_space<vmem>>, %arg11: memref<16x16xf32, #tpu.memory_space<vmem>>, %arg12: memref<8x8xf32, #tpu.memory_space<vmem>>, %arg13: memref<8x8xf32, #tpu.memory_space<vmem>>, %arg14: memref<3x16x16xf32, #tpu.memory_space<vmem>>) attributes {dimension_semantics = [#tpu.dimension_semantics<parallel>], iteration_bounds = array<i64: 2>, scalar_prefetch = 0 : i64, scratch_operands = 0 : i64, tpu.core_type = #tpu.core_type<tc>, window_params = [{transform_indices = @transform_0, window_bounds = array<i64: 3, 16, 16>}, {pipeline_mode = #tpu.pipeline_mode<synchronous>, transform_indices = @transform_1, window_bounds = array<i64: 16, 16>}, {pipeline_mode = #tpu.pipeline_mode<synchronous>, transform_indices = @transform_2, window_bounds = array<i64: 16, 16>}, {pipeline_mode = #tpu.pipeline_mode<synchronous>, transform_indices = @transform_3, window_bounds = array<i64: 16, 16>}, {pipeline_mode = #tpu.pipeline_mode<synchronous>, transform_indices = @transform_4, window_bounds = array<i64: 16, 16>}, {pipeline_mode = #tpu.pipeline_mode<synchronous>, transform_indices = @transform_5, window_bounds = array<i64: 8, 16>}, {pipeline_mode = #tpu.pipeline_mode<synchronous>, transform_indices = @transform_6, window_bounds = array<i64: 16, 8>}, {pipeline_mode = #tpu.pipeline_mode<synchronous>, transform_indices = @transform_7, window_bounds = array<i64: 16, 8>}, {pipeline_mode = #tpu.pipeline_mode<synchronous>, transform_indices = @transform_8, window_bounds = array<i64: 8, 16>}, {pipeline_mode = #tpu.pipeline_mode<synchronous>, transform_indices = @transform_9, window_bounds = array<i64: 16, 16>}, {pipeline_mode = #tpu.pipeline_mode<synchronous>, transform_indices = @transform_10, window_bounds = array<i64: 16, 16>}, {pipeline_mode = #tpu.pipeline_mode<synchronous>, transform_indices = @transform_11, window_bounds = array<i64: 8, 8>}, {pipeline_mode = #tpu.pipeline_mode<synchronous>, transform_indices = @transform_12, window_bounds = array<i64: 8, 8>}, {transform_indices = @transform_13, window_bounds = array<i64: 3, 16, 16>}]} {
    %c0 = arith.constant 0 : index
    %c0_0 = arith.constant 0 : index
    %c0_1 = arith.constant 0 : index
    %0 = vector.load %arg1[%c0, %c0_0, %c0_1] : memref<3x16x16xf32, #tpu.memory_space<vmem>>, vector<1x16x16xf32>
    %1 = vector.shape_cast %0 : vector<1x16x16xf32> to vector<16x16xf32>
    %cst = arith.constant 2.550000e+02 : f32
    %2 = vector.broadcast %cst : f32 to vector<16x16xf32>
    %3 = arith.mulf %1, %2 : vector<16x16xf32>
    %c1 = arith.constant 1 : index
    %c0_2 = arith.constant 0 : index
    %c0_3 = arith.constant 0 : index
    %4 = vector.load %arg1[%c1, %c0_2, %c0_3] : memref<3x16x16xf32, #tpu.memory_space<vmem>>, vector<1x16x16xf32>
    %5 = vector.shape_cast %4 : vector<1x16x16xf32> to vector<16x16xf32>
    %cst_4 = arith.constant 2.550000e+02 : f32
    %6 = vector.broadcast %cst_4 : f32 to vector<16x16xf32>
    %7 = arith.mulf %5, %6 : vector<16x16xf32>
    %c2 = arith.constant 2 : index
    %c0_5 = arith.constant 0 : index
    %c0_6 = arith.constant 0 : index
    %8 = vector.load %arg1[%c2, %c0_5, %c0_6] : memref<3x16x16xf32, #tpu.memory_space<vmem>>, vector<1x16x16xf32>
    %9 = vector.shape_cast %8 : vector<1x16x16xf32> to vector<16x16xf32>
    %cst_7 = arith.constant 2.550000e+02 : f32
    %10 = vector.broadcast %cst_7 : f32 to vector<16x16xf32>
    %11 = arith.mulf %9, %10 : vector<16x16xf32>
    %cst_8 = arith.constant 2.990000e-01 : f32
    %12 = vector.broadcast %cst_8 : f32 to vector<16x16xf32>
    %13 = arith.mulf %12, %3 : vector<16x16xf32>
    %cst_9 = arith.constant 5.870000e-01 : f32
    %14 = vector.broadcast %cst_9 : f32 to vector<16x16xf32>
    %15 = arith.mulf %14, %7 : vector<16x16xf32>
    %16 = arith.addf %13, %15 : vector<16x16xf32>
    %cst_10 = arith.constant 1.140000e-01 : f32
    %17 = vector.broadcast %cst_10 : f32 to vector<16x16xf32>
    %18 = arith.mulf %17, %11 : vector<16x16xf32>
    %19 = arith.addf %16, %18 : vector<16x16xf32>
    %cst_11 = arith.constant -1.687360e-01 : f32
    %20 = vector.broadcast %cst_11 : f32 to vector<16x16xf32>
    %21 = arith.mulf %20, %3 : vector<16x16xf32>
    %cst_12 = arith.constant 3.312640e-01 : f32
    %22 = vector.broadcast %cst_12 : f32 to vector<16x16xf32>
    %23 = arith.mulf %22, %7 : vector<16x16xf32>
    %24 = arith.subf %21, %23 : vector<16x16xf32>
    %cst_13 = arith.constant 5.000000e-01 : f32
    %25 = vector.broadcast %cst_13 : f32 to vector<16x16xf32>
    %26 = arith.mulf %25, %11 : vector<16x16xf32>
    %27 = arith.addf %24, %26 : vector<16x16xf32>
    %cst_14 = arith.constant 1.280000e+02 : f32
    %28 = vector.broadcast %cst_14 : f32 to vector<16x16xf32>
    %29 = arith.addf %27, %28 : vector<16x16xf32>
    %cst_15 = arith.constant 5.000000e-01 : f32
    %30 = vector.broadcast %cst_15 : f32 to vector<16x16xf32>
    %31 = arith.mulf %30, %3 : vector<16x16xf32>
    %cst_16 = arith.constant 4.186880e-01 : f32
    %32 = vector.broadcast %cst_16 : f32 to vector<16x16xf32>
    %33 = arith.mulf %32, %7 : vector<16x16xf32>
    %34 = arith.subf %31, %33 : vector<16x16xf32>
    %cst_17 = arith.constant 8.131200e-02 : f32
    %35 = vector.broadcast %cst_17 : f32 to vector<16x16xf32>
    %36 = arith.mulf %35, %11 : vector<16x16xf32>
    %37 = arith.subf %34, %36 : vector<16x16xf32>
    %cst_18 = arith.constant 1.280000e+02 : f32
    %38 = vector.broadcast %cst_18 : f32 to vector<16x16xf32>
    %39 = arith.addf %37, %38 : vector<16x16xf32>
    %c0_19 = arith.constant 0 : index
    %c0_20 = arith.constant 0 : index
    %40 = vector.load %arg2[%c0_19, %c0_20] : memref<16x16xf32, #tpu.memory_space<vmem>>, vector<16x16xf32>
    %cst_21 = arith.constant 1.280000e+02 : f32
    %41 = vector.broadcast %cst_21 : f32 to vector<16x16xf32>
    %42 = arith.subf %19, %41 : vector<16x16xf32>
    %cst_22 = arith.constant dense<0.000000e+00> : vector<16x16xf32>
    %43 = tpu.matmul %40, %42, %cst_22 {dimension_numbers = #tpu.dot_dimension_numbers<[1], [0], [0], [1], [0, 0, 1, 1], [], []>} : vector<16x16xf32>, vector<16x16xf32>, vector<16x16xf32> -> vector<16x16xf32>
    %c0_23 = arith.constant 0 : index
    %c0_24 = arith.constant 0 : index
    %44 = vector.load %arg3[%c0_23, %c0_24] : memref<16x16xf32, #tpu.memory_space<vmem>>, vector<16x16xf32>
    %cst_25 = arith.constant dense<0.000000e+00> : vector<16x16xf32>
    %45 = tpu.matmul %43, %44, %cst_25 {dimension_numbers = #tpu.dot_dimension_numbers<[1], [0], [0], [1], [0, 0, 1, 1], [], []>} : vector<16x16xf32>, vector<16x16xf32>, vector<16x16xf32> -> vector<16x16xf32>
    %c0_26 = arith.constant 0 : index
    %c0_27 = arith.constant 0 : index
    %46 = vector.load %arg10[%c0_26, %c0_27] : memref<16x16xf32, #tpu.memory_space<vmem>>, vector<16x16xf32>
    %47 = arith.mulf %45, %46 : vector<16x16xf32>
    %48 = math.roundeven %47 : vector<16x16xf32>
    %c0_28 = arith.constant 0 : index
    %c0_29 = arith.constant 0 : index
    %49 = vector.load %arg11[%c0_28, %c0_29] : memref<16x16xf32, #tpu.memory_space<vmem>>, vector<16x16xf32>
    %50 = arith.mulf %48, %49 : vector<16x16xf32>
    %c0_30 = arith.constant 0 : index
    %c0_31 = arith.constant 0 : index
    %51 = vector.load %arg4[%c0_30, %c0_31] : memref<16x16xf32, #tpu.memory_space<vmem>>, vector<16x16xf32>
    %cst_32 = arith.constant dense<0.000000e+00> : vector<16x16xf32>
    %52 = tpu.matmul %51, %50, %cst_32 {dimension_numbers = #tpu.dot_dimension_numbers<[1], [0], [0], [1], [0, 0, 1, 1], [], []>} : vector<16x16xf32>, vector<16x16xf32>, vector<16x16xf32> -> vector<16x16xf32>
    %c0_33 = arith.constant 0 : index
    %c0_34 = arith.constant 0 : index
    %53 = vector.load %arg5[%c0_33, %c0_34] : memref<16x16xf32, #tpu.memory_space<vmem>>, vector<16x16xf32>
    %cst_35 = arith.constant dense<0.000000e+00> : vector<16x16xf32>
    %54 = tpu.matmul %52, %53, %cst_35 {dimension_numbers = #tpu.dot_dimension_numbers<[1], [0], [0], [1], [0, 0, 1, 1], [], []>} : vector<16x16xf32>, vector<16x16xf32>, vector<16x16xf32> -> vector<16x16xf32>
    %cst_36 = arith.constant 1.280000e+02 : f32
    %55 = vector.broadcast %cst_36 : f32 to vector<16x16xf32>
    %56 = arith.addf %54, %55 : vector<16x16xf32>
    %c0_37 = arith.constant 0 : index
    %c0_38 = arith.constant 0 : index
    %57 = vector.load %arg6[%c0_37, %c0_38] : memref<8x16xf32, #tpu.memory_space<vmem>>, vector<8x16xf32>
    %cst_39 = arith.constant 1.280000e+02 : f32
    %58 = vector.broadcast %cst_39 : f32 to vector<16x16xf32>
    %59 = arith.subf %29, %58 : vector<16x16xf32>
    %cst_40 = arith.constant dense<0.000000e+00> : vector<8x16xf32>
    %60 = tpu.matmul %57, %59, %cst_40 {dimension_numbers = #tpu.dot_dimension_numbers<[1], [0], [0], [1], [0, 0, 1, 1], [], []>} : vector<8x16xf32>, vector<16x16xf32>, vector<8x16xf32> -> vector<8x16xf32>
    %c0_41 = arith.constant 0 : index
    %c0_42 = arith.constant 0 : index
    %61 = vector.load %arg7[%c0_41, %c0_42] : memref<16x8xf32, #tpu.memory_space<vmem>>, vector<16x8xf32>
    %cst_43 = arith.constant dense<0.000000e+00> : vector<8x8xf32>
    %62 = tpu.matmul %60, %61, %cst_43 {dimension_numbers = #tpu.dot_dimension_numbers<[1], [0], [0], [1], [0, 0, 1, 1], [], []>} : vector<8x16xf32>, vector<16x8xf32>, vector<8x8xf32> -> vector<8x8xf32>
    %c0_44 = arith.constant 0 : index
    %c0_45 = arith.constant 0 : index
    %63 = vector.load %arg12[%c0_44, %c0_45] : memref<8x8xf32, #tpu.memory_space<vmem>>, vector<8x8xf32>
    %64 = arith.mulf %62, %63 : vector<8x8xf32>
    %65 = math.roundeven %64 : vector<8x8xf32>
    %c0_46 = arith.constant 0 : index
    %c0_47 = arith.constant 0 : index
    %66 = vector.load %arg13[%c0_46, %c0_47] : memref<8x8xf32, #tpu.memory_space<vmem>>, vector<8x8xf32>
    %67 = arith.mulf %65, %66 : vector<8x8xf32>
    %c0_48 = arith.constant 0 : index
    %c0_49 = arith.constant 0 : index
    %68 = vector.load %arg8[%c0_48, %c0_49] : memref<16x8xf32, #tpu.memory_space<vmem>>, vector<16x8xf32>
    %cst_50 = arith.constant dense<0.000000e+00> : vector<16x8xf32>
    %69 = tpu.matmul %68, %67, %cst_50 {dimension_numbers = #tpu.dot_dimension_numbers<[1], [0], [0], [1], [0, 0, 1, 1], [], []>} : vector<16x8xf32>, vector<8x8xf32>, vector<16x8xf32> -> vector<16x8xf32>
    %c0_51 = arith.constant 0 : index
    %c0_52 = arith.constant 0 : index
    %70 = vector.load %arg9[%c0_51, %c0_52] : memref<8x16xf32, #tpu.memory_space<vmem>>, vector<8x16xf32>
    %cst_53 = arith.constant dense<0.000000e+00> : vector<16x16xf32>
    %71 = tpu.matmul %69, %70, %cst_53 {dimension_numbers = #tpu.dot_dimension_numbers<[1], [0], [0], [1], [0, 0, 1, 1], [], []>} : vector<16x8xf32>, vector<8x16xf32>, vector<16x16xf32> -> vector<16x16xf32>
    %cst_54 = arith.constant 1.280000e+02 : f32
    %72 = vector.broadcast %cst_54 : f32 to vector<16x16xf32>
    %73 = arith.addf %71, %72 : vector<16x16xf32>
    %cst_55 = arith.constant 1.280000e+02 : f32
    %74 = vector.broadcast %cst_55 : f32 to vector<16x16xf32>
    %75 = arith.subf %73, %74 : vector<16x16xf32>
    %c0_56 = arith.constant 0 : index
    %c0_57 = arith.constant 0 : index
    %76 = vector.load %arg6[%c0_56, %c0_57] : memref<8x16xf32, #tpu.memory_space<vmem>>, vector<8x16xf32>
    %cst_58 = arith.constant 1.280000e+02 : f32
    %77 = vector.broadcast %cst_58 : f32 to vector<16x16xf32>
    %78 = arith.subf %39, %77 : vector<16x16xf32>
    %cst_59 = arith.constant dense<0.000000e+00> : vector<8x16xf32>
    %79 = tpu.matmul %76, %78, %cst_59 {dimension_numbers = #tpu.dot_dimension_numbers<[1], [0], [0], [1], [0, 0, 1, 1], [], []>} : vector<8x16xf32>, vector<16x16xf32>, vector<8x16xf32> -> vector<8x16xf32>
    %c0_60 = arith.constant 0 : index
    %c0_61 = arith.constant 0 : index
    %80 = vector.load %arg7[%c0_60, %c0_61] : memref<16x8xf32, #tpu.memory_space<vmem>>, vector<16x8xf32>
    %cst_62 = arith.constant dense<0.000000e+00> : vector<8x8xf32>
    %81 = tpu.matmul %79, %80, %cst_62 {dimension_numbers = #tpu.dot_dimension_numbers<[1], [0], [0], [1], [0, 0, 1, 1], [], []>} : vector<8x16xf32>, vector<16x8xf32>, vector<8x8xf32> -> vector<8x8xf32>
    %c0_63 = arith.constant 0 : index
    %c0_64 = arith.constant 0 : index
    %82 = vector.load %arg12[%c0_63, %c0_64] : memref<8x8xf32, #tpu.memory_space<vmem>>, vector<8x8xf32>
    %83 = arith.mulf %81, %82 : vector<8x8xf32>
    %84 = math.roundeven %83 : vector<8x8xf32>
    %c0_65 = arith.constant 0 : index
    %c0_66 = arith.constant 0 : index
    %85 = vector.load %arg13[%c0_65, %c0_66] : memref<8x8xf32, #tpu.memory_space<vmem>>, vector<8x8xf32>
    %86 = arith.mulf %84, %85 : vector<8x8xf32>
    %c0_67 = arith.constant 0 : index
    %c0_68 = arith.constant 0 : index
    %87 = vector.load %arg8[%c0_67, %c0_68] : memref<16x8xf32, #tpu.memory_space<vmem>>, vector<16x8xf32>
    %cst_69 = arith.constant dense<0.000000e+00> : vector<16x8xf32>
    %88 = tpu.matmul %87, %86, %cst_69 {dimension_numbers = #tpu.dot_dimension_numbers<[1], [0], [0], [1], [0, 0, 1, 1], [], []>} : vector<16x8xf32>, vector<8x8xf32>, vector<16x8xf32> -> vector<16x8xf32>
    %c0_70 = arith.constant 0 : index
    %c0_71 = arith.constant 0 : index
    %89 = vector.load %arg9[%c0_70, %c0_71] : memref<8x16xf32, #tpu.memory_space<vmem>>, vector<8x16xf32>
    %cst_72 = arith.constant dense<0.000000e+00> : vector<16x16xf32>
    %90 = tpu.matmul %88, %89, %cst_72 {dimension_numbers = #tpu.dot_dimension_numbers<[1], [0], [0], [1], [0, 0, 1, 1], [], []>} : vector<16x8xf32>, vector<8x16xf32>, vector<16x16xf32> -> vector<16x16xf32>
    %cst_73 = arith.constant 1.280000e+02 : f32
    %91 = vector.broadcast %cst_73 : f32 to vector<16x16xf32>
    %92 = arith.addf %90, %91 : vector<16x16xf32>
    %cst_74 = arith.constant 1.280000e+02 : f32
    %93 = vector.broadcast %cst_74 : f32 to vector<16x16xf32>
    %94 = arith.subf %92, %93 : vector<16x16xf32>
    %cst_75 = arith.constant 1.402000e+00 : f32
    %95 = vector.broadcast %cst_75 : f32 to vector<16x16xf32>
    %96 = arith.mulf %95, %94 : vector<16x16xf32>
    %97 = arith.addf %56, %96 : vector<16x16xf32>
    %cst_76 = arith.constant 3.441360e-01 : f32
    %98 = vector.broadcast %cst_76 : f32 to vector<16x16xf32>
    %99 = arith.mulf %98, %75 : vector<16x16xf32>
    %100 = arith.subf %56, %99 : vector<16x16xf32>
    %cst_77 = arith.constant 7.141360e-01 : f32
    %101 = vector.broadcast %cst_77 : f32 to vector<16x16xf32>
    %102 = arith.mulf %101, %94 : vector<16x16xf32>
    %103 = arith.subf %100, %102 : vector<16x16xf32>
    %cst_78 = arith.constant 1.772000e+00 : f32
    %104 = vector.broadcast %cst_78 : f32 to vector<16x16xf32>
    %105 = arith.mulf %104, %75 : vector<16x16xf32>
    %106 = arith.addf %56, %105 : vector<16x16xf32>
    %cst_79 = arith.constant 0.000000e+00 : f32
    %cst_80 = arith.constant 2.550000e+02 : f32
    %107 = vector.broadcast %cst_79 : f32 to vector<16x16xf32>
    %108 = arith.maximumf %107, %97 : vector<16x16xf32>
    %109 = vector.broadcast %cst_80 : f32 to vector<16x16xf32>
    %110 = arith.minimumf %109, %108 : vector<16x16xf32>
    %cst_81 = arith.constant 0.00392156886 : f32
    %111 = vector.broadcast %cst_81 : f32 to vector<16x16xf32>
    %112 = arith.mulf %110, %111 : vector<16x16xf32>
    %c0_82 = arith.constant 0 : index
    %c0_83 = arith.constant 0 : index
    %c0_84 = arith.constant 0 : index
    %113 = vector.load %arg14[%c0_82, %c0_83, %c0_84] : memref<3x16x16xf32, #tpu.memory_space<vmem>>, vector<1x16x16xf32>
    %114 = vector.shape_cast %113 : vector<1x16x16xf32> to vector<16x16xf32>
    %115 = vector.shape_cast %112 : vector<16x16xf32> to vector<1x16x16xf32>
    tpu.vector_store %arg14[%c0_82, %c0_83, %c0_84], %115 {strides = array<i32>} : memref<3x16x16xf32, #tpu.memory_space<vmem>>, vector<1x16x16xf32>,
    %cst_85 = arith.constant 0.000000e+00 : f32
    %cst_86 = arith.constant 2.550000e+02 : f32
    %116 = vector.broadcast %cst_85 : f32 to vector<16x16xf32>
    %117 = arith.maximumf %116, %103 : vector<16x16xf32>
    %118 = vector.broadcast %cst_86 : f32 to vector<16x16xf32>
    %119 = arith.minimumf %118, %117 : vector<16x16xf32>
    %cst_87 = arith.constant 0.00392156886 : f32
    %120 = vector.broadcast %cst_87 : f32 to vector<16x16xf32>
    %121 = arith.mulf %119, %120 : vector<16x16xf32>
    %c1_88 = arith.constant 1 : index
    %c0_89 = arith.constant 0 : index
    %c0_90 = arith.constant 0 : index
    %122 = vector.load %arg14[%c1_88, %c0_89, %c0_90] : memref<3x16x16xf32, #tpu.memory_space<vmem>>, vector<1x16x16xf32>
    %123 = vector.shape_cast %122 : vector<1x16x16xf32> to vector<16x16xf32>
    %124 = vector.shape_cast %121 : vector<16x16xf32> to vector<1x16x16xf32>
    tpu.vector_store %arg14[%c1_88, %c0_89, %c0_90], %124 {strides = array<i32>} : memref<3x16x16xf32, #tpu.memory_space<vmem>>, vector<1x16x16xf32>,
    %cst_91 = arith.constant 0.000000e+00 : f32
    %cst_92 = arith.constant 2.550000e+02 : f32
    %125 = vector.broadcast %cst_91 : f32 to vector<16x16xf32>
    %126 = arith.maximumf %125, %106 : vector<16x16xf32>
    %127 = vector.broadcast %cst_92 : f32 to vector<16x16xf32>
    %128 = arith.minimumf %127, %126 : vector<16x16xf32>
    %cst_93 = arith.constant 0.00392156886 : f32
    %129 = vector.broadcast %cst_93 : f32 to vector<16x16xf32>
    %130 = arith.mulf %128, %129 : vector<16x16xf32>
    %c2_94 = arith.constant 2 : index
    %c0_95 = arith.constant 0 : index
    %c0_96 = arith.constant 0 : index
    %131 = vector.load %arg14[%c2_94, %c0_95, %c0_96] : memref<3x16x16xf32, #tpu.memory_space<vmem>>, vector<1x16x16xf32>
    %132 = vector.shape_cast %131 : vector<1x16x16xf32> to vector<16x16xf32>
    %133 = vector.shape_cast %130 : vector<16x16xf32> to vector<1x16x16xf32>
    tpu.vector_store %arg14[%c2_94, %c0_95, %c0_96], %133 {strides = array<i32>} : memref<3x16x16xf32, #tpu.memory_space<vmem>>, vector<1x16x16xf32>,
    return
  }
  func.func @transform_0(%arg0: i32) -> (i32, i32, i32) {
    %c0_i32 = arith.constant 0 : i32
    %c0_i32_0 = arith.constant 0 : i32
    %c0_i32_1 = arith.constant 0 : i32
    return %arg0, %c0_i32, %c0_i32_0 : i32, i32, i32
  }
  func.func @transform_1(%arg0: i32) -> (i32, i32) {
    %c0_i32 = arith.constant 0 : i32
    %c0_i32_0 = arith.constant 0 : i32
    %c0_i32_1 = arith.constant 0 : i32
    return %c0_i32, %c0_i32_0 : i32, i32
  }
  func.func @transform_2(%arg0: i32) -> (i32, i32) {
    %c0_i32 = arith.constant 0 : i32
    %c0_i32_0 = arith.constant 0 : i32
    %c0_i32_1 = arith.constant 0 : i32
    return %c0_i32, %c0_i32_0 : i32, i32
  }
  func.func @transform_3(%arg0: i32) -> (i32, i32) {
    %c0_i32 = arith.constant 0 : i32
    %c0_i32_0 = arith.constant 0 : i32
    %c0_i32_1 = arith.constant 0 : i32
    return %c0_i32, %c0_i32_0 : i32, i32
  }
  func.func @transform_4(%arg0: i32) -> (i32, i32) {
    %c0_i32 = arith.constant 0 : i32
    %c0_i32_0 = arith.constant 0 : i32
    %c0_i32_1 = arith.constant 0 : i32
    return %c0_i32, %c0_i32_0 : i32, i32
  }
  func.func @transform_5(%arg0: i32) -> (i32, i32) {
    %c0_i32 = arith.constant 0 : i32
    %c0_i32_0 = arith.constant 0 : i32
    %c0_i32_1 = arith.constant 0 : i32
    return %c0_i32, %c0_i32_0 : i32, i32
  }
  func.func @transform_6(%arg0: i32) -> (i32, i32) {
    %c0_i32 = arith.constant 0 : i32
    %c0_i32_0 = arith.constant 0 : i32
    %c0_i32_1 = arith.constant 0 : i32
    return %c0_i32, %c0_i32_0 : i32, i32
  }
  func.func @transform_7(%arg0: i32) -> (i32, i32) {
    %c0_i32 = arith.constant 0 : i32
    %c0_i32_0 = arith.constant 0 : i32
    %c0_i32_1 = arith.constant 0 : i32
    return %c0_i32, %c0_i32_0 : i32, i32
  }
  func.func @transform_8(%arg0: i32) -> (i32, i32) {
    %c0_i32 = arith.constant 0 : i32
    %c0_i32_0 = arith.constant 0 : i32
    %c0_i32_1 = arith.constant 0 : i32
    return %c0_i32, %c0_i32_0 : i32, i32
  }
  func.func @transform_9(%arg0: i32) -> (i32, i32) {
    %c0_i32 = arith.constant 0 : i32
    %c0_i32_0 = arith.constant 0 : i32
    %c0_i32_1 = arith.constant 0 : i32
    return %c0_i32, %c0_i32_0 : i32, i32
  }
  func.func @transform_10(%arg0: i32) -> (i32, i32) {
    %c0_i32 = arith.constant 0 : i32
    %c0_i32_0 = arith.constant 0 : i32
    %c0_i32_1 = arith.constant 0 : i32
    return %c0_i32, %c0_i32_0 : i32, i32
  }
  func.func @transform_11(%arg0: i32) -> (i32, i32) {
    %c0_i32 = arith.constant 0 : i32
    %c0_i32_0 = arith.constant 0 : i32
    %c0_i32_1 = arith.constant 0 : i32
    return %c0_i32, %c0_i32_0 : i32, i32
  }
  func.func @transform_12(%arg0: i32) -> (i32, i32) {
    %c0_i32 = arith.constant 0 : i32
    %c0_i32_0 = arith.constant 0 : i32
    %c0_i32_1 = arith.constant 0 : i32
    return %c0_i32, %c0_i32_0 : i32, i32
  }
  func.func @transform_13(%arg0: i32) -> (i32, i32, i32) {
    %c0_i32 = arith.constant 0 : i32
    %c0_i32_0 = arith.constant 0 : i32
    %c0_i32_1 = arith.constant 0 : i32
    return %arg0, %c0_i32, %c0_i32_0 : i32, i32, i32
  }
}

</mosaic_0001>

<llo_original>
// kernel: _lambda_.1
$region0: #{_lambda_.1}
  #allocation0 [shape = 'u32[]', space=smem, size = 0x4, offset = 0x4, fixed_abs, tag = 'smem constant byte address 0x4 - core index']
  #allocation1 [shape = 'u32[144,128]{1,0:T(1,128)}', space=vmem, size = 0x12000, scoped, tag = 'internal scratch']
  %s0 = inlined_call_operand.hbm [shape: f32[6,16,16], index: 0, kind: input, shape index: {}]
  %s1 = inlined_call_operand.hbm [shape: f32[16,16], index: 1, kind: input, shape index: {}, may-alias: {1,4}]
  %s2 = inlined_call_operand.hbm [shape: f32[16,16], index: 2, kind: input, shape index: {}, may-alias: {2,3}]
  %s3 = inlined_call_operand.hbm [shape: f32[16,16], index: 3, kind: input, shape index: {}, may-alias: {2,3}]
  %s4 = inlined_call_operand.hbm [shape: f32[16,16], index: 4, kind: input, shape index: {}, may-alias: {1,4}]
  %s5 = inlined_call_operand.hbm [shape: f32[8,16], index: 5, kind: input, shape index: {}]
  %s6 = inlined_call_operand.hbm [shape: f32[16,8], index: 6, kind: input, shape index: {}]
  %s7 = inlined_call_operand.hbm [shape: f32[16,8], index: 7, kind: input, shape index: {}]
  %s8 = inlined_call_operand.hbm [shape: f32[8,16], index: 8, kind: input, shape index: {}]
  %s9 = inlined_call_operand.hbm [shape: f32[16,16], index: 9, kind: input, shape index: {}]
  %s10 = inlined_call_operand.vmem [shape: f32[16,16], index: 10, kind: input, shape index: {}]
  %s11 = inlined_call_operand.vmem [shape: f32[8,8], index: 11, kind: input, shape index: {}]
  %s12 = inlined_call_operand.vmem [shape: f32[8,8], index: 12, kind: input, shape index: {}]
  %s13 = inlined_call_operand.hbm [shape: f32[6,16,16], index: 13, kind: output, shape index: {}]
  %s14 = sld [smem:[#allocation0]]
  $region125: #{_lambda_.1} parent=0
    _
  %s16 = ssub.s32 1, %s14
  %s17 = scalar_select 0, %s16, %s14
  $region1: #{_lambda_.1} parent=0
    #allocation2 [shape = 'u8[49152]{0}', space=vmem, size = 0xc000, scoped, tag = 'input window, operand 0']
    #allocation3 [shape = 's32[2]{0}', space=sflag, size = 0x8, scoped, tag = 'scoped memory for _lambda_.1']
    #allocation4 [shape = 's32[2]{0}', space=sflag, size = 0x8, scoped, tag = 'scoped memory for _lambda_.1']
    #allocation5 [shape = 'u8[8192]{0}', space=vmem, size = 0x2000, scoped, tag = 'input window, operand 1, single buffered']
    #allocation6 [shape = 's32[1]{0}', space=sflag, size = 0x4, scoped, tag = 'scoped memory for _lambda_.1']
    #allocation7 [shape = 'u8[8192]{0}', space=vmem, size = 0x2000, scoped, tag = 'input window, operand 2, single buffered']
    #allocation8 [shape = 'u8[8192]{0}', space=vmem, size = 0x2000, scoped, tag = 'input window, operand 3, single buffered']
    #allocation9 [shape = 's32[1]{0}', space=sflag, size = 0x4, scoped, tag = 'scoped memory for _lambda_.1']
    #allocation10 [shape = 'u8[8192]{0}', space=vmem, size = 0x2000, scoped, tag = 'input window, operand 4, single buffered']
    #allocation11 [shape = 'u8[4096]{0}', space=vmem, size = 0x1000, scoped, tag = 'input window, operand 5, single buffered']
    #allocation12 [shape = 's32[1]{0}', space=sflag, size = 0x4, scoped, tag = 'scoped memory for _lambda_.1']
    #allocation13 [shape = 'u8[8192]{0}', space=vmem, size = 0x2000, scoped, tag = 'input window, operand 6, single buffered']
    #allocation14 [shape = 'u8[8192]{0}', space=vmem, size = 0x2000, scoped, tag = 'input window, operand 7, single buffered']
    #allocation15 [shape = 's32[1]{0}', space=sflag, size = 0x4, scoped, tag = 'scoped memory for _lambda_.1']
    #allocation16 [shape = 'u8[4096]{0}', space=vmem, size = 0x1000, scoped, tag = 'input window, operand 8, single buffered']
    #allocation17 [shape = 'u8[8192]{0}', space=vmem, size = 0x2000, scoped, tag = 'input window, operand 9, single buffered']
    #allocation18 [shape = 's32[1]{0}', space=sflag, size = 0x4, scoped, tag = 'scoped memory for _lambda_.1']
    #allocation19 [shape = 'u8[49152]{0}', space=vmem, size = 0xc000, scoped, tag = 'output window, operand 0']
    %18 = vsyncpa [#allocation3], 0
    %s19 = scalar_lea.sflag [#allocation3], 1
    %20 = vsyncpa %s19, 0
    %21 = vsyncpa [#allocation6], 0
    %22 = vsyncpa [#allocation9], 0
    %23 = vsyncpa [#allocation12], 0
    %24 = vsyncpa [#allocation15], 0
    %25 = vsyncpa [#allocation18], 0
    %26 = vsyncpa [#allocation4], 0
    %s27 = scalar_lea.sflag [#allocation4], 1
    %28 = vsyncpa %s27, 0
    loop: start=0, step=1, limit=4
    $region2: #{_lambda_.1} parent=1 // loop_pre_header
      _
    $region3: #{_lambda_.1} parent=1 // loop_header
      %s30 = sphi 0, %s34
      %p31 = scmp.ge.s32.totalorder %s30, 4
      %s40 = sphi 0, %s42
      %s43 = sphi 0, %s40
      %s44 = sphi 0, %s43
      %s60 = sphi 0, %s44
      %s64 = sphi 0, %s64
      %s66 = sphi 0, %s64
      %s67 = sphi 0, %s66
      %s81 = sphi 0, %s67
      %s85 = sphi 0, %s85
      %s87 = sphi 0, %s85
      %s88 = sphi 0, %s87
      %s102 = sphi 0, %s88
      %s106 = sphi 0, %s106
      %s108 = sphi 0, %s106
      %s109 = sphi 0, %s108
      %s123 = sphi 0, %s109
      %s127 = sphi 0, %s127
      %s129 = sphi 0, %s127
      %s130 = sphi 0, %s129
      %s144 = sphi 0, %s130
      %s148 = sphi 0, %s148
      %s150 = sphi 0, %s148
      %s151 = sphi 0, %s150
      %s165 = sphi 0, %s151
      %s169 = sphi 0, %s169
      %s171 = sphi 0, %s169
      %s172 = sphi 0, %s171
      %s186 = sphi 0, %s172
      %s190 = sphi 0, %s190
      %s192 = sphi 0, %s190
      %s193 = sphi 0, %s192
      %s207 = sphi 0, %s193
      %s211 = sphi 0, %s211
      %s213 = sphi 0, %s211
      %s214 = sphi 0, %s213
      %s228 = sphi 0, %s214
      %s232 = sphi 0, %s232
      %s234 = sphi 0, %s232
      %s235 = sphi 0, %s234
      %s249 = sphi 0, %s235
      %s253 = sphi 0, %s253
      %s255 = sphi 0, %s253
      %s256 = sphi 0, %s255
      %s270 = sphi 0, %s256
      %s274 = sphi 0, %s274
      %s276 = sphi 0, %s274
      %s277 = sphi 0, %s276
      %s291 = sphi 0, %s277
      %s295 = sphi 0, %s295
      %s297 = sphi 0, %s295
      %s298 = sphi 0, %s297
      %s312 = sphi 0, %s298
      %s318 = sphi 0, %s320
      %s321 = sphi 0, %s318
      %s322 = sphi 0, %s321
      %s338 = sphi 0, %s322
    $region4: #{_lambda_.1} parent=1 // loop_header_branch
      %33 = sbr.rel (%p31) target = $region8
    $region5: #{_lambda_.1} parent=1 // loop_body
      %s35 = ssub.s32 %s30, 1
      %s36 = ssub.s32 %s30, 2
      %s37 = sadd.s32 %s30, 1
      %s38 = ssub.s32 %s30, %s37
      %p39 = scmp.eq.s32.totalorder %s38, 0
      %s41 = sadd.s32 %s40, 1
      %s42 = scalar_select %p39, %s40, %s41
      %p45 = pneg %p39
      %p46 = scmp.eq.s32.totalorder %s30, 1
      %p47 = por %p45, %p46
      %p48 = scmp.ne.s32.totalorder %s40, %s43
      %p49 = scmp.eq.s32.totalorder %s30, 0
      %p50 = por %p48, %p49
      %p51 = scmp.ne.s32.totalorder %s40, %s43
      %p52 = scmp.eq.s32.totalorder %s35, 1
      %p53 = por %p51, %p52
      %p54 = scmp.ne.s32.totalorder %s43, %s44
      %p55 = scmp.eq.s32.totalorder %s35, 0
      %p56 = por %p54, %p55
      %p57 = scmp.ne.s32.totalorder %s43, %s44
      %p58 = scmp.eq.s32.totalorder %s36, 1
      %p59 = por %p57, %p58
      %p61 = scmp.ne.s32.totalorder %s44, %s60
      %p62 = scmp.eq.s32.totalorder %s36, 0
      %p63 = por %p61, %p62
      %s65 = sadd.s32 %s64, 1
      %p68 = scmp.eq.s32.totalorder %s30, 1
      %p69 = scmp.ne.s32.totalorder %s64, %s66
      %p70 = scmp.eq.s32.totalorder %s30, 0
      %p71 = por %p69, %p70
      %p72 = scmp.ne.s32.totalorder %s64, %s66
      %p73 = scmp.eq.s32.totalorder %s35, 1
      %p74 = por %p72, %p73
      %p75 = scmp.ne.s32.totalorder %s66, %s67
      %p76 = scmp.eq.s32.totalorder %s35, 0
      %p77 = por %p75, %p76
      %p78 = scmp.ne.s32.totalorder %s66, %s67
      %p79 = scmp.eq.s32.totalorder %s36, 1
      %p80 = por %p78, %p79
      %p82 = scmp.ne.s32.totalorder %s67, %s81
      %p83 = scmp.eq.s32.totalorder %s36, 0
      %p84 = por %p82, %p83
      %s86 = sadd.s32 %s85, 1
      %p89 = scmp.eq.s32.totalorder %s30, 1
      %p90 = scmp.ne.s32.totalorder %s85, %s87
      %p91 = scmp.eq.s32.totalorder %s30, 0
      %p92 = por %p90, %p91
      %p93 = scmp.ne.s32.totalorder %s85, %s87
      %p94 = scmp.eq.s32.totalorder %s35, 1
      %p95 = por %p93, %p94
      %p96 = scmp.ne.s32.totalorder %s87, %s88
      %p97 = scmp.eq.s32.totalorder %s35, 0
      %p98 = por %p96, %p97
      %p99 = scmp.ne.s32.totalorder %s87, %s88
      %p100 = scmp.eq.s32.totalorder %s36, 1
      %p101 = por %p99, %p100
      %p103 = scmp.ne.s32.totalorder %s88, %s102
      %p104 = scmp.eq.s32.totalorder %s36, 0
      %p105 = por %p103, %p104
      %s107 = sadd.s32 %s106, 1
      %p110 = scmp.eq.s32.totalorder %s30, 1
      %p111 = scmp.ne.s32.totalorder %s106, %s108
      %p112 = scmp.eq.s32.totalorder %s30, 0
      %p113 = por %p111, %p112
      %p114 = scmp.ne.s32.totalorder %s106, %s108
      %p115 = scmp.eq.s32.totalorder %s35, 1
      %p116 = por %p114, %p115
      %p117 = scmp.ne.s32.totalorder %s108, %s109
      %p118 = scmp.eq.s32.totalorder %s35, 0
      %p119 = por %p117, %p118
      %p120 = scmp.ne.s32.totalorder %s108, %s109
      %p121 = scmp.eq.s32.totalorder %s36, 1
      %p122 = por %p120, %p121
      %p124 = scmp.ne.s32.totalorder %s109, %s123
      %p125 = scmp.eq.s32.totalorder %s36, 0
      %p126 = por %p124, %p125
      %s128 = sadd.s32 %s127, 1
      %p131 = scmp.eq.s32.totalorder %s30, 1
      %p132 = scmp.ne.s32.totalorder %s127, %s129
      %p133 = scmp.eq.s32.totalorder %s30, 0
      %p134 = por %p132, %p133
      %p135 = scmp.ne.s32.totalorder %s127, %s129
      %p136 = scmp.eq.s32.totalorder %s35, 1
      %p137 = por %p135, %p136
      %p138 = scmp.ne.s32.totalorder %s129, %s130
      %p139 = scmp.eq.s32.totalorder %s35, 0
      %p140 = por %p138, %p139
      %p141 = scmp.ne.s32.totalorder %s129, %s130
      %p142 = scmp.eq.s32.totalorder %s36, 1
      %p143 = por %p141, %p142
      %p145 = scmp.ne.s32.totalorder %s130, %s144
      %p146 = scmp.eq.s32.totalorder %s36, 0
      %p147 = por %p145, %p146
      %s149 = sadd.s32 %s148, 1
      %p152 = scmp.eq.s32.totalorder %s30, 1
      %p153 = scmp.ne.s32.totalorder %s148, %s150
      %p154 = scmp.eq.s32.totalorder %s30, 0
      %p155 = por %p153, %p154
      %p156 = scmp.ne.s32.totalorder %s148, %s150
      %p157 = scmp.eq.s32.totalorder %s35, 1
      %p158 = por %p156, %p157
      %p159 = scmp.ne.s32.totalorder %s150, %s151
      %p160 = scmp.eq.s32.totalorder %s35, 0
      %p161 = por %p159, %p160
      %p162 = scmp.ne.s32.totalorder %s150, %s151
      %p163 = scmp.eq.s32.totalorder %s36, 1
      %p164 = por %p162, %p163
      %p166 = scmp.ne.s32.totalorder %s151, %s165
      %p167 = scmp.eq.s32.totalorder %s36, 0
      %p168 = por %p166, %p167
      %s170 = sadd.s32 %s169, 1
      %p173 = scmp.eq.s32.totalorder %s30, 1
      %p174 = scmp.ne.s32.totalorder %s169, %s171
      %p175 = scmp.eq.s32.totalorder %s30, 0
      %p176 = por %p174, %p175
      %p177 = scmp.ne.s32.totalorder %s169, %s171
      %p178 = scmp.eq.s32.totalorder %s35, 1
      %p179 = por %p177, %p178
      %p180 = scmp.ne.s32.totalorder %s171, %s172
      %p181 = scmp.eq.s32.totalorder %s35, 0
      %p182 = por %p180, %p181
      %p183 = scmp.ne.s32.totalorder %s171, %s172
      %p184 = scmp.eq.s32.totalorder %s36, 1
      %p185 = por %p183, %p184
      %p187 = scmp.ne.s32.totalorder %s172, %s186
      %p188 = scmp.eq.s32.totalorder %s36, 0
      %p189 = por %p187, %p188
      %s191 = sadd.s32 %s190, 1
      %p194 = scmp.eq.s32.totalorder %s30, 1
      %p195 = scmp.ne.s32.totalorder %s190, %s192
      %p196 = scmp.eq.s32.totalorder %s30, 0
      %p197 = por %p195, %p196
      %p198 = scmp.ne.s32.totalorder %s190, %s192
      %p199 = scmp.eq.s32.totalorder %s35, 1
      %p200 = por %p198, %p199
      %p201 = scmp.ne.s32.totalorder %s192, %s193
      %p202 = scmp.eq.s32.totalorder %s35, 0
      %p203 = por %p201, %p202
      %p204 = scmp.ne.s32.totalorder %s192, %s193
      %p205 = scmp.eq.s32.totalorder %s36, 1
      %p206 = por %p204, %p205
      %p208 = scmp.ne.s32.totalorder %s193, %s207
      %p209 = scmp.eq.s32.totalorder %s36, 0
      %p210 = por %p208, %p209
      %s212 = sadd.s32 %s211, 1
      %p215 = scmp.eq.s32.totalorder %s30, 1
      %p216 = scmp.ne.s32.totalorder %s211, %s213
      %p217 = scmp.eq.s32.totalorder %s30, 0
      %p218 = por %p216, %p217
      %p219 = scmp.ne.s32.totalorder %s211, %s213
      %p220 = scmp.eq.s32.totalorder %s35, 1
      %p221 = por %p219, %p220
      %p222 = scmp.ne.s32.totalorder %s213, %s214
      %p223 = scmp.eq.s32.totalorder %s35, 0
      %p224 = por %p222, %p223
      %p225 = scmp.ne.s32.totalorder %s213, %s214
      %p226 = scmp.eq.s32.totalorder %s36, 1
      %p227 = por %p225, %p226
      %p229 = scmp.ne.s32.totalorder %s214, %s228
      %p230 = scmp.eq.s32.totalorder %s36, 0
      %p231 = por %p229, %p230
      %s233 = sadd.s32 %s232, 1
      %p236 = scmp.eq.s32.totalorder %s30, 1
      %p237 = scmp.ne.s32.totalorder %s232, %s234
      %p238 = scmp.eq.s32.totalorder %s30, 0
      %p239 = por %p237, %p238
      %p240 = scmp.ne.s32.totalorder %s232, %s234
      %p241 = scmp.eq.s32.totalorder %s35, 1
      %p242 = por %p240, %p241
      %p243 = scmp.ne.s32.totalorder %s234, %s235
      %p244 = scmp.eq.s32.totalorder %s35, 0
      %p245 = por %p243, %p244
      %p246 = scmp.ne.s32.totalorder %s234, %s235
      %p247 = scmp.eq.s32.totalorder %s36, 1
      %p248 = por %p246, %p247
      %p250 = scmp.ne.s32.totalorder %s235, %s249
      %p251 = scmp.eq.s32.totalorder %s36, 0
      %p252 = por %p250, %p251
      %s254 = sadd.s32 %s253, 1
      %p257 = scmp.eq.s32.totalorder %s30, 1
      %p258 = scmp.ne.s32.totalorder %s253, %s255
      %p259 = scmp.eq.s32.totalorder %s30, 0
      %p260 = por %p258, %p259
      %p261 = scmp.ne.s32.totalorder %s253, %s255
      %p262 = scmp.eq.s32.totalorder %s35, 1
      %p263 = por %p261, %p262
      %p264 = scmp.ne.s32.totalorder %s255, %s256
      %p265 = scmp.eq.s32.totalorder %s35, 0
      %p266 = por %p264, %p265
      %p267 = scmp.ne.s32.totalorder %s255, %s256
      %p268 = scmp.eq.s32.totalorder %s36, 1
      %p269 = por %p267, %p268
      %p271 = scmp.ne.s32.totalorder %s256, %s270
      %p272 = scmp.eq.s32.totalorder %s36, 0
      %p273 = por %p271, %p272
      %s275 = sadd.s32 %s274, 1
      %p278 = scmp.eq.s32.totalorder %s30, 1
      %p279 = scmp.ne.s32.totalorder %s274, %s276
      %p280 = scmp.eq.s32.totalorder %s30, 0
      %p281 = por %p279, %p280
      %p282 = scmp.ne.s32.totalorder %s274, %s276
      %p283 = scmp.eq.s32.totalorder %s35, 1
      %p284 = por %p282, %p283
      %p285 = scmp.ne.s32.totalorder %s276, %s277
      %p286 = scmp.eq.s32.totalorder %s35, 0
      %p287 = por %p285, %p286
      %p288 = scmp.ne.s32.totalorder %s276, %s277
      %p289 = scmp.eq.s32.totalorder %s36, 1
      %p290 = por %p288, %p289
      %p292 = scmp.ne.s32.totalorder %s277, %s291
      %p293 = scmp.eq.s32.totalorder %s36, 0
      %p294 = por %p292, %p293
      %s296 = sadd.s32 %s295, 1
      %p299 = scmp.eq.s32.totalorder %s30, 1
      %p300 = scmp.ne.s32.totalorder %s295, %s297
      %p301 = scmp.eq.s32.totalorder %s30, 0
      %p302 = por %p300, %p301
      %p303 = scmp.ne.s32.totalorder %s295, %s297
      %p304 = scmp.eq.s32.totalorder %s35, 1
      %p305 = por %p303, %p304
      %p306 = scmp.ne.s32.totalorder %s297, %s298
      %p307 = scmp.eq.s32.totalorder %s35, 0
      %p308 = por %p306, %p307
      %p309 = scmp.ne.s32.totalorder %s297, %s298
      %p310 = scmp.eq.s32.totalorder %s36, 1
      %p311 = por %p309, %p310
      %p313 = scmp.ne.s32.totalorder %s298, %s312
      %p314 = scmp.eq.s32.totalorder %s36, 0
      %p315 = por %p313, %p314
      %s316 = ssub.s32 %s30, %s37
      %p317 = scmp.eq.s32.totalorder %s316, 0
      %s319 = sadd.s32 %s318, 1
      %s320 = scalar_select %p317, %s318, %s319
      %p323 = pneg %p317
      %p324 = scmp.eq.s32.totalorder %s30, 1
      %p325 = por %p323, %p324
      %p326 = scmp.ne.s32.totalorder %s318, %s321
      %p327 = scmp.eq.s32.totalorder %s30, 0
      %p328 = por %p326, %p327
      %p329 = scmp.ne.s32.totalorder %s318, %s321
      %p330 = scmp.eq.s32.totalorder %s35, 1
      %p331 = por %p329, %p330
      %p332 = scmp.ne.s32.totalorder %s321, %s322
      %p333 = scmp.eq.s32.totalorder %s35, 0
      %p334 = por %p332, %p333
      %p335 = scmp.ne.s32.totalorder %s321, %s322
      %p336 = scmp.eq.s32.totalorder %s36, 1
      %p337 = por %p335, %p336
      %p339 = scmp.ne.s32.totalorder %s322, %s338
      %p340 = scmp.eq.s32.totalorder %s36, 0
      %p341 = por %p339, %p340
      %p342 = scmp.le.s32.totalorder 1, %s30
      %p343 = scmp.lt.s32.totalorder %s30, 3
      %p344 = pnand %p342, %p343
      %p345 = pneg %p344
      // Predicated region
      $region9: #{_lambda_.1} parent=5 // pred_check
        _
      $region10: #{_lambda_.1} parent=5 // pred_check_branch
        %347 = sbr.rel (%p344) target = $region12
      $region11: #{_lambda_.1} parent=5 // pred_region
        %s348 = ssub.s32 %s30, 1
        // Predicated region
        $region13: #{_lambda_.1} parent=11 // pred_check
          %p349 = pneg %p77
        $region14: #{_lambda_.1} parent=11 // pred_check_branch
          %351 = sbr.rel (%p349) target = $region16
        $region15: #{_lambda_.1} parent=11 // pred_region
          %s353 = ssub.s32 256, 256
          %354 = vsyncadd [#allocation6], %s353
          %s355 = sshll.u32 [#allocation5], 4
          %s356 = int_to_ptr.vmem [resolvable:$true] %s355
          %361 = dma.hbm_to_vmem [thread:$0]  %s1, 256, %s356, [#allocation6], 128, 128, 8
        $region16: #{_lambda_.1} parent=11 // pred_fallthru
          _
        // Predicated region
        $region17: #{_lambda_.1} parent=11 // pred_check
          %p362 = pneg %p98
        $region18: #{_lambda_.1} parent=11 // pred_check_branch
          %364 = sbr.rel (%p362) target = $region20
        $region19: #{_lambda_.1} parent=11 // pred_region
          %s366 = ssub.s32 256, 256
          %367 = vsyncadd [#allocation6], %s366
          %s368 = sshll.u32 [#allocation7], 4
          %s369 = int_to_ptr.vmem [resolvable:$true] %s368
          %374 = dma.hbm_to_vmem [thread:$0]  %s2, 256, %s369, [#allocation6], 128, 128, 8
        $region20: #{_lambda_.1} parent=11 // pred_fallthru
          _
        // Predicated region
        $region21: #{_lambda_.1} parent=11 // pred_check
          %p375 = pneg %p119
        $region22: #{_lambda_.1} parent=11 // pred_check_branch
          %377 = sbr.rel (%p375) target = $region24
        $region23: #{_lambda_.1} parent=11 // pred_region
          %s379 = ssub.s32 256, 256
          %380 = vsyncadd [#allocation9], %s379
          %s381 = sshll.u32 [#allocation8], 4
          %s382 = int_to_ptr.vmem [resolvable:$true] %s381
          %387 = dma.hbm_to_vmem [thread:$0]  %s3, 256, %s382, [#allocation9], 128, 128, 8
        $region24: #{_lambda_.1} parent=11 // pred_fallthru
          _
        // Predicated region
        $region25: #{_lambda_.1} parent=11 // pred_check
          %p388 = pneg %p140
        $region26: #{_lambda_.1} parent=11 // pred_check_branch
          %390 = sbr.rel (%p388) target = $region28
        $region27: #{_lambda_.1} parent=11 // pred_region
          %s392 = ssub.s32 256, 256
          %393 = vsyncadd [#allocation9], %s392
          %s394 = sshll.u32 [#allocation10], 4
          %s395 = int_to_ptr.vmem [resolvable:$true] %s394
          %400 = dma.hbm_to_vmem [thread:$0]  %s4, 256, %s395, [#allocation9], 128, 128, 8
        $region28: #{_lambda_.1} parent=11 // pred_fallthru
          _
        // Predicated region
        $region29: #{_lambda_.1} parent=11 // pred_check
          %p401 = pneg %p161
        $region30: #{_lambda_.1} parent=11 // pred_check_branch
          %403 = sbr.rel (%p401) target = $region32
        $region31: #{_lambda_.1} parent=11 // pred_region
          %s405 = ssub.s32 128, 128
          %406 = vsyncadd [#allocation12], %s405
          %s408 = sshll.u32 [#allocation11], 4
          %s409 = int_to_ptr.vmem [resolvable:$true] %s408
          %411 = dma.hbm_to_vmem [thread:$0]  %s5, 128, %s409, [#allocation12]
        $region32: #{_lambda_.1} parent=11 // pred_fallthru
          _
        // Predicated region
        $region33: #{_lambda_.1} parent=11 // pred_check
          %p412 = pneg %p182
        $region34: #{_lambda_.1} parent=11 // pred_check_branch
          %414 = sbr.rel (%p412) target = $region36
        $region35: #{_lambda_.1} parent=11 // pred_region
          %s416 = ssub.s32 256, 256
          %417 = vsyncadd [#allocation12], %s416
          %s418 = sshll.u32 [#allocation13], 4
          %s419 = int_to_ptr.vmem [resolvable:$true] %s418
          %424 = dma.hbm_to_vmem [thread:$0]  %s6, 256, %s419, [#allocation12], 128, 128, 8
        $region36: #{_lambda_.1} parent=11 // pred_fallthru
          _
        // Predicated region
        $region37: #{_lambda_.1} parent=11 // pred_check
          %p425 = pneg %p203
        $region38: #{_lambda_.1} parent=11 // pred_check_branch
          %427 = sbr.rel (%p425) target = $region40
        $region39: #{_lambda_.1} parent=11 // pred_region
          %s429 = ssub.s32 256, 256
          %430 = vsyncadd [#allocation15], %s429
          %s431 = sshll.u32 [#allocation14], 4
          %s432 = int_to_ptr.vmem [resolvable:$true] %s431
          %437 = dma.hbm_to_vmem [thread:$0]  %s7, 256, %s432, [#allocation15], 128, 128, 8
        $region40: #{_lambda_.1} parent=11 // pred_fallthru
          _
        // Predicated region
        $region41: #{_lambda_.1} parent=11 // pred_check
          %p438 = pneg %p224
        $region42: #{_lambda_.1} parent=11 // pred_check_branch
          %440 = sbr.rel (%p438) target = $region44
        $region43: #{_lambda_.1} parent=11 // pred_region
          %s442 = ssub.s32 128, 128
          %443 = vsyncadd [#allocation15], %s442
          %s445 = sshll.u32 [#allocation16], 4
          %s446 = int_to_ptr.vmem [resolvable:$true] %s445
          %448 = dma.hbm_to_vmem [thread:$0]  %s8, 128, %s446, [#allocation15]
        $region44: #{_lambda_.1} parent=11 // pred_fallthru
          _
        // Predicated region
        $region45: #{_lambda_.1} parent=11 // pred_check
          %p449 = pneg %p245
        $region46: #{_lambda_.1} parent=11 // pred_check_branch
          %451 = sbr.rel (%p449) target = $region48
        $region47: #{_lambda_.1} parent=11 // pred_region
          %s453 = ssub.s32 256, 256
          %454 = vsyncadd [#allocation18], %s453
          %s455 = sshll.u32 [#allocation17], 4
          %s456 = int_to_ptr.vmem [resolvable:$true] %s455
          %461 = dma.hbm_to_vmem [thread:$0]  %s9, 256, %s456, [#allocation18], 128, 128, 8
        $region48: #{_lambda_.1} parent=11 // pred_fallthru
          _
        // Predicated region
        $region49: #{_lambda_.1} parent=11 // pred_check
          %p462 = pneg %p266
        $region50: #{_lambda_.1} parent=11 // pred_check_branch
          %464 = sbr.rel (%p462) target = $region52
        $region51: #{_lambda_.1} parent=11 // pred_region
          _
        $region52: #{_lambda_.1} parent=11 // pred_fallthru
          _
        // Predicated region
        $region53: #{_lambda_.1} parent=11 // pred_check
          %p465 = pneg %p287
        $region54: #{_lambda_.1} parent=11 // pred_check_branch
          %467 = sbr.rel (%p465) target = $region56
        $region55: #{_lambda_.1} parent=11 // pred_region
          _
        $region56: #{_lambda_.1} parent=11 // pred_fallthru
          _
        // Predicated region
        $region57: #{_lambda_.1} parent=11 // pred_check
          %p468 = pneg %p308
        $region58: #{_lambda_.1} parent=11 // pred_check_branch
          %470 = sbr.rel (%p468) target = $region60
        $region59: #{_lambda_.1} parent=11 // pred_region
          _
        $region60: #{_lambda_.1} parent=11 // pred_fallthru
          _
      $region12: #{_lambda_.1} parent=5 // pred_fallthru
        _
      %p471 = scmp.lt.s32.totalorder %s30, 2
      // Predicated region
      $region61: #{_lambda_.1} parent=5 // pred_check
        %p472 = pneg %p471
      $region62: #{_lambda_.1} parent=5 // pred_check_branch
        %474 = sbr.rel (%p472) target = $region64
      $region63: #{_lambda_.1} parent=5 // pred_region
        // Predicated region
        $region65: #{_lambda_.1} parent=63 // pred_check
          %p475 = pneg %p50
        $region66: #{_lambda_.1} parent=63 // pred_check_branch
          %477 = sbr.rel (%p475) target = $region68
        $region67: #{_lambda_.1} parent=63 // pred_region
          %s478 = sand.u32 %s40, 1
          %s479 = scalar_lea.sflag [#allocation3], %s478
          %s480 = sand.u32 %s40, 1
          %s481 = smul.addr %s480, 48
          %s482 = scalar_lea.vmem [#allocation2], %s481
          %s483 = smul.u32 3, %s30
          %s485 = ssub.s32 768, 768
          %486 = vsyncadd %s479, %s485
          %s487 = smul.addr %s483, 2
          %s488 = smul.addr %s487, 128
          %s489 = scalar_lea.hbm %s0, %s488
          %s490 = sshll.u32 %s482, 4
          %s491 = int_to_ptr.vmem [resolvable:$true] %s490
          %496 = dma.hbm_to_vmem [thread:$0]  %s489, 768, %s491, %s479, 128, 128, 8
        $region68: #{_lambda_.1} parent=63 // pred_fallthru
          _
      $region64: #{_lambda_.1} parent=5 // pred_fallthru
        _
      %p497 = scmp.le.s32.totalorder 1, %s30
      %p498 = scmp.lt.s32.totalorder %s30, 3
      %p499 = pnand %p497, %p498
      %p500 = pneg %p499
      // Predicated region
      $region69: #{_lambda_.1} parent=5 // pred_check
        _
      $region70: #{_lambda_.1} parent=5 // pred_check_branch
        %502 = sbr.rel (%p499) target = $region72
      $region71: #{_lambda_.1} parent=5 // pred_region
        %s503 = ssub.s32 %s30, 1
        %s504 = sand.u32 %s43, 1
        %s505 = scalar_lea.sflag [#allocation3], %s504
        %s506 = sand.u32 %s43, 1
        %s507 = smul.addr %s506, 48
        %s508 = scalar_lea.vmem [#allocation2], %s507
        // Predicated region
        $region73: #{_lambda_.1} parent=71 // pred_check
          %p509 = pneg %p56
        $region74: #{_lambda_.1} parent=71 // pred_check_branch
          %511 = sbr.rel (%p509) target = $region76
        $region75: #{_lambda_.1} parent=71 // pred_region
          %512 = dma.done %s505, 768
        $region76: #{_lambda_.1} parent=71 // pred_fallthru
          _
        // Predicated region
        $region77: #{_lambda_.1} parent=71 // pred_check
          %p513 = pneg %p77
        $region78: #{_lambda_.1} parent=71 // pred_check_branch
          %515 = sbr.rel (%p513) target = $region80
        $region79: #{_lambda_.1} parent=71 // pred_region
          %516 = dma.done [#allocation6], 256
        $region80: #{_lambda_.1} parent=71 // pred_fallthru
          _
        // Predicated region
        $region81: #{_lambda_.1} parent=71 // pred_check
          %p517 = pneg %p98
        $region82: #{_lambda_.1} parent=71 // pred_check_branch
          %519 = sbr.rel (%p517) target = $region84
        $region83: #{_lambda_.1} parent=71 // pred_region
          %520 = dma.done [#allocation6], 256
        $region84: #{_lambda_.1} parent=71 // pred_fallthru
          _
        // Predicated region
        $region85: #{_lambda_.1} parent=71 // pred_check
          %p521 = pneg %p119
        $region86: #{_lambda_.1} parent=71 // pred_check_branch
          %523 = sbr.rel (%p521) target = $region88
        $region87: #{_lambda_.1} parent=71 // pred_region
          %524 = dma.done [#allocation9], 256
        $region88: #{_lambda_.1} parent=71 // pred_fallthru
          _
        // Predicated region
        $region89: #{_lambda_.1} parent=71 // pred_check
          %p525 = pneg %p140
        $region90: #{_lambda_.1} parent=71 // pred_check_branch
          %527 = sbr.rel (%p525) target = $region92
        $region91: #{_lambda_.1} parent=71 // pred_region
          %528 = dma.done [#allocation9], 256
        $region92: #{_lambda_.1} parent=71 // pred_fallthru
          _
        // Predicated region
        $region93: #{_lambda_.1} parent=71 // pred_check
          %p529 = pneg %p161
        $region94: #{_lambda_.1} parent=71 // pred_check_branch
          %531 = sbr.rel (%p529) target = $region96
        $region95: #{_lambda_.1} parent=71 // pred_region
          %532 = dma.done [#allocation12], 128
        $region96: #{_lambda_.1} parent=71 // pred_fallthru
          _
        // Predicated region
        $region97: #{_lambda_.1} parent=71 // pred_check
          %p533 = pneg %p182
        $region98: #{_lambda_.1} parent=71 // pred_check_branch
          %535 = sbr.rel (%p533) target = $region100
        $region99: #{_lambda_.1} parent=71 // pred_region
          %536 = dma.done [#allocation12], 256
        $region100: #{_lambda_.1} parent=71 // pred_fallthru
          _
        // Predicated region
        $region101: #{_lambda_.1} parent=71 // pred_check
          %p537 = pneg %p203
        $region102: #{_lambda_.1} parent=71 // pred_check_branch
          %539 = sbr.rel (%p537) target = $region104
        $region103: #{_lambda_.1} parent=71 // pred_region
          %540 = dma.done [#allocation15], 256
        $region104: #{_lambda_.1} parent=71 // pred_fallthru
          _
        // Predicated region
        $region105: #{_lambda_.1} parent=71 // pred_check
          %p541 = pneg %p224
        $region106: #{_lambda_.1} parent=71 // pred_check_branch
          %543 = sbr.rel (%p541) target = $region108
        $region107: #{_lambda_.1} parent=71 // pred_region
          %544 = dma.done [#allocation15], 128
        $region108: #{_lambda_.1} parent=71 // pred_fallthru
          _
        // Predicated region
        $region109: #{_lambda_.1} parent=71 // pred_check
          %p545 = pneg %p245
        $region110: #{_lambda_.1} parent=71 // pred_check_branch
          %547 = sbr.rel (%p545) target = $region112
        $region111: #{_lambda_.1} parent=71 // pred_region
          %548 = dma.done [#allocation18], 256
        $region112: #{_lambda_.1} parent=71 // pred_fallthru
          _
        %s549 = sand.u32 %s43, 1
        %s550 = scalar_lea.sflag [#allocation3], %s549
        %s551 = sand.u32 %s43, 1
        %s552 = smul.addr %s551, 48
        %s553 = scalar_lea.vmem [#allocation2], %s552
        %p554 = pneg %p56
        %p555 = pneg %p53
        %p556 = pneg %p77
        %p557 = pneg %p74
        %p558 = pneg %p98
        %p559 = pneg %p95
        %p560 = pneg %p119
        %p561 = pneg %p116
        %p562 = pneg %p140
        %p563 = pneg %p137
        %p564 = pneg %p161
        %p565 = pneg %p158
        %p566 = pneg %p182
        %p567 = pneg %p179
        %p568 = pneg %p203
        %p569 = pneg %p200
        %p570 = pneg %p224
        %p571 = pneg %p221
        %p572 = pneg %p245
        %p573 = pneg %p242
        %p574 = pneg %p266
        %p575 = pneg %p263
        %p576 = pneg %p287
        %p577 = pneg %p284
        %p578 = pneg %p308
        %p579 = pneg %p305
        %p580 = pneg %p334
        %p581 = pneg %p331
        %s582 = sand.u32 %s321, 1
        %s583 = scalar_lea.sflag [#allocation4], %s582
        %s584 = sand.u32 %s321, 1
        %s585 = smul.addr %s584, 48
        %s586 = scalar_lea.vmem [#allocation19], %s585
        %s587 = smul.u32 3, %s35
        %s588 = smul.u32 3, %s35
        %v589 = vld [vmem:[%s508] sm:$0xff]
        %v590 = vld [vmem:[%s508 + $0x8] sm:$0xff]
        %v591 = vmul.f32 %v589, 255.0
        %v592 = vmul.f32 %v590, 255.0
        %s593 = scalar_lea.vmem %s508, 16 [#allocation2]
        %v594 = vld [vmem:[%s593] sm:$0xff]
        %v595 = vld [vmem:[%s593 + $0x8] sm:$0xff]
        %v596 = vmul.f32 %v594, 255.0
        %v597 = vmul.f32 %v595, 255.0
        %s598 = scalar_lea.vmem %s508, 32 [#allocation2]
        %v599 = vld [vmem:[%s598] sm:$0xff]
        %v600 = vld [vmem:[%s598 + $0x8] sm:$0xff]
        %v601 = vmul.f32 %v599, 255.0
        %v602 = vmul.f32 %v600, 255.0
        %v603 = vmul.f32 %v591, 0.299
        %v604 = vmul.f32 %v592, 0.299
        %v605 = vmul.f32 %v596, 0.587
        %v606 = vmul.f32 %v597, 0.587
        %v607 = vadd.f32 %v603, %v605
        %v608 = vadd.f32 %v604, %v606
        %v609 = vmul.f32 %v601, 0.114
        %v610 = vmul.f32 %v602, 0.114
        %v611 = vadd.f32 %v607, %v609
        %v612 = vadd.f32 %v608, %v610
        %v613 = vmul.f32 %v591, -0.168736
        %v614 = vmul.f32 %v592, -0.168736
        %v615 = vmul.f32 %v596, 0.331264
        %v616 = vmul.f32 %v597, 0.331264
        %v617 = vsub.f32 %v613, %v615
        %v618 = vsub.f32 %v614, %v616
        %v619 = vmul.f32 %v601, 0.5
        %v620 = vmul.f32 %v602, 0.5
        %v621 = vadd.f32 %v617, %v619
        %v622 = vadd.f32 %v618, %v620
        %v623 = vadd.f32 %v621, 128.0
        %v624 = vadd.f32 %v622, 128.0
        %v625 = vmul.f32 %v591, 0.5
        %v626 = vmul.f32 %v592, 0.5
        %v627 = vmul.f32 %v596, 0.418688
        %v628 = vmul.f32 %v597, 0.418688
        %v629 = vsub.f32 %v625, %v627
        %v630 = vsub.f32 %v626, %v628
        %v631 = vmul.f32 %v601, 0.081312
        %v632 = vmul.f32 %v602, 0.081312
        %v633 = vsub.f32 %v629, %v631
        %v634 = vsub.f32 %v630, %v632
        %v635 = vadd.f32 %v633, 128.0
        %v636 = vadd.f32 %v634, 128.0
        %v637 = vld [vmem:[#allocation5] sm:$0xff]
        %v638 = vld [vmem:[#allocation5 + $0x8] sm:$0xff]
        %v639 = vsub.f32 %v611, 128.0
        %v640 = vsub.f32 %v612, 128.0
        %vm641 = vcmask 130048
        %v643 = vsel %vm641, %v637, 0
        %v646 = vsel %vm641, %v638, 0
        %648 = vmatprep.subr.mxu0 0.0
        %649 = vmatpush1.msra.mxu0 %v639
        %650 = vmatprep.subr.mxu0 0.0
        %651 = vmatpush1.msra.mxu0 %v640
        %652 = vmatprep.subr.mxu0 0.0
        %653 = vmatpush1.msra.mxu0 0.0
        %654 = vmatprep.subr.mxu0 0.0
        %655 = vmatpush1.msra.mxu0 0.0
        %656 = vmatprep.subr.mxu0 0.0
        %657 = vmatpush1.msra.mxu0 0.0
        %658 = vmatprep.subr.mxu0 0.0
        %659 = vmatpush1.msra.mxu0 0.0
        %660 = vmatprep.subr.mxu0 0.0
        %661 = vmatpush1.msra.mxu0 0.0
        %662 = vmatprep.subr.mxu0 0.0
        %663 = vmatpush1.msra.mxu0 0.0
        %664 = vmatprep.subr.mxu0 0.0
        %665 = vmatpush1.msra.mxu0 0.0
        %666 = vmatprep.subr.mxu0 0.0
        %667 = vmatpush1.msra.mxu0 0.0
        %668 = vmatprep.subr.mxu0 0.0
        %669 = vmatpush1.msra.mxu0 0.0
        %670 = vmatprep.subr.mxu0 0.0
        %671 = vmatpush1.msra.mxu0 0.0
        %672 = vmatprep.subr.mxu0 0.0
        %673 = vmatpush1.msra.mxu0 0.0
        %674 = vmatprep.subr.mxu0 0.0
        %675 = vmatpush1.msra.mxu0 0.0
        %676 = vmatprep.subr.mxu0 0.0
        %677 = vmatpush1.msra.mxu0 0.0
        %678 = vmatprep.subr.mxu0 0.0
        %679 = vmatpush1.msra.mxu0 0.0
        %680 = vmatprep.subr.mxu0 0.0
        %681 = vmatpush1.msra.mxu0 0.0
        %682 = vmatprep.subr.mxu0 0.0
        %683 = vmatpush1.msra.mxu0 0.0
        %684 = vmatprep.subr.mxu0 0.0
        %685 = vmatpush1.msra.mxu0 0.0
        %686 = vmatprep.subr.mxu0 0.0
        %687 = vmatpush1.msra.mxu0 0.0
        %688 = vmatprep.subr.mxu0 0.0
        %689 = vmatpush1.msra.mxu0 0.0
        %690 = vmatprep.subr.mxu0 0.0
        %691 = vmatpush1.msra.mxu0 0.0
        %692 = vmatprep.subr.mxu0 0.0
        %693 = vmatpush1.msra.mxu0 0.0
        %694 = vmatprep.subr.mxu0 0.0
        %695 = vmatpush1.msra.mxu0 0.0
        %696 = vmatprep.subr.mxu0 0.0
        %697 = vmatpush1.msra.mxu0 0.0
        %698 = vmatprep.subr.mxu0 0.0
        %699 = vmatpush1.msra.mxu0 0.0
        %700 = vmatprep.subr.mxu0 0.0
        %701 = vmatpush1.msra.mxu0 0.0
        %702 = vmatprep.subr.mxu0 0.0
        %703 = vmatpush1.msra.mxu0 0.0
        %704 = vmatprep.subr.mxu0 0.0
        %705 = vmatpush1.msra.mxu0 0.0
        %706 = vmatprep.subr.mxu0 0.0
        %707 = vmatpush1.msra.mxu0 0.0
        %708 = vmatprep.subr.mxu0 0.0
        %709 = vmatpush1.msra.mxu0 0.0
        %710 = vmatprep.subr.mxu0 0.0
        %711 = vmatpush1.msra.mxu0 0.0
        %712 = vmatprep.mubr.f32.mxu0 0.0
        %713 = vmatmul.mubr.f32.gmra.mrb[0].mxu0 %v643
        %v714 = vpop.f32.mrb[0].mxu0
        %v715 = vadd.f32 0.0, %v714
        %v716 = vpop.f32.mrb[0].mxu0
        %717 = vmatprep.mubr.f32.mxu0 0.0
        %718 = vmatmul.mubr.f32.gmra.mrb[0].mxu0 %v646
        %v719 = vpop.f32.mrb[0].mxu0
        %v720 = vadd.f32 0.0, %v719
        %v721 = vpop.f32.mrb[0].mxu0
        %722 = vdwg.mxu0
        %v723 = vld [vmem:[#allocation7] sm:$0xff]
        %v724 = vld [vmem:[#allocation7 + $0x8] sm:$0xff]
        %v726 = vsel %vm641, %v715, 0
        %v729 = vsel %vm641, %v720, 0
        %731 = vmatprep.subr.mxu0 0.0
        %732 = vmatpush1.msra.mxu0 %v723
        %733 = vmatprep.subr.mxu0 0.0
        %734 = vmatpush1.msra.mxu0 %v724
        %735 = vmatprep.subr.mxu0 0.0
        %736 = vmatpush1.msra.mxu0 0.0
        %737 = vmatprep.subr.mxu0 0.0
        %738 = vmatpush1.msra.mxu0 0.0
        %739 = vmatprep.subr.mxu0 0.0
        %740 = vmatpush1.msra.mxu0 0.0
        %741 = vmatprep.subr.mxu0 0.0
        %742 = vmatpush1.msra.mxu0 0.0
        %743 = vmatprep.subr.mxu0 0.0
        %744 = vmatpush1.msra.mxu0 0.0
        %745 = vmatprep.subr.mxu0 0.0
        %746 = vmatpush1.msra.mxu0 0.0
        %747 = vmatprep.subr.mxu0 0.0
        %748 = vmatpush1.msra.mxu0 0.0
        %749 = vmatprep.subr.mxu0 0.0
        %750 = vmatpush1.msra.mxu0 0.0
        %751 = vmatprep.subr.mxu0 0.0
        %752 = vmatpush1.msra.mxu0 0.0
        %753 = vmatprep.subr.mxu0 0.0
        %754 = vmatpush1.msra.mxu0 0.0
        %755 = vmatprep.subr.mxu0 0.0
        %756 = vmatpush1.msra.mxu0 0.0
        %757 = vmatprep.subr.mxu0 0.0
        %758 = vmatpush1.msra.mxu0 0.0
        %759 = vmatprep.subr.mxu0 0.0
        %760 = vmatpush1.msra.mxu0 0.0
        %761 = vmatprep.subr.mxu0 0.0
        %762 = vmatpush1.msra.mxu0 0.0
        %763 = vmatprep.subr.mxu0 0.0
        %764 = vmatpush1.msra.mxu0 0.0
        %765 = vmatprep.subr.mxu0 0.0
        %766 = vmatpush1.msra.mxu0 0.0
        %767 = vmatprep.subr.mxu0 0.0
        %768 = vmatpush1.msra.mxu0 0.0
        %769 = vmatprep.subr.mxu0 0.0
        %770 = vmatpush1.msra.mxu0 0.0
        %771 = vmatprep.subr.mxu0 0.0
        %772 = vmatpush1.msra.mxu0 0.0
        %773 = vmatprep.subr.mxu0 0.0
        %774 = vmatpush1.msra.mxu0 0.0
        %775 = vmatprep.subr.mxu0 0.0
        %776 = vmatpush1.msra.mxu0 0.0
        %777 = vmatprep.subr.mxu0 0.0
        %778 = vmatpush1.msra.mxu0 0.0
        %779 = vmatprep.subr.mxu0 0.0
        %780 = vmatpush1.msra.mxu0 0.0
        %781 = vmatprep.subr.mxu0 0.0
        %782 = vmatpush1.msra.mxu0 0.0
        %783 = vmatprep.subr.mxu0 0.0
        %784 = vmatpush1.msra.mxu0 0.0
        %785 = vmatprep.subr.mxu0 0.0
        %786 = vmatpush1.msra.mxu0 0.0
        %787 = vmatprep.subr.mxu0 0.0
        %788 = vmatpush1.msra.mxu0 0.0
        %789 = vmatprep.subr.mxu0 0.0
        %790 = vmatpush1.msra.mxu0 0.0
        %791 = vmatprep.subr.mxu0 0.0
        %792 = vmatpush1.msra.mxu0 0.0
        %793 = vmatprep.subr.mxu0 0.0
        %794 = vmatpush1.msra.mxu0 0.0
        %795 = vmatprep.mubr.f32.mxu0 0.0
        %796 = vmatmul.mubr.f32.gmra.mrb[0].mxu0 %v726
        %v797 = vpop.f32.mrb[0].mxu0
        %v798 = vadd.f32 0.0, %v797
        %v799 = vpop.f32.mrb[0].mxu0
        %800 = vmatprep.mubr.f32.mxu0 0.0
        %801 = vmatmul.mubr.f32.gmra.mrb[0].mxu0 %v729
        %v802 = vpop.f32.mrb[0].mxu0
        %v803 = vadd.f32 0.0, %v802
        %v804 = vpop.f32.mrb[0].mxu0
        %805 = vdwg.mxu0
        %v806 = vld [vmem:[#allocation17] sm:$0xff]
        %v807 = vld [vmem:[#allocation17 + $0x8] sm:$0xff]
        %v808 = vmul.f32 %v798, %v806
        %v809 = vmul.f32 %v803, %v807
        %v810 = vround.ne.pseudo %v808
        %v811 = vround.ne.pseudo %v809
        %v812 = vld [vmem:[%s10] sm:$0xff]
        %v813 = vld [vmem:[%s10 + $0x8] sm:$0xff]
        %v814 = vmul.f32 %v810, %v812
        %v815 = vmul.f32 %v811, %v813
        %v816 = vld [vmem:[#allocation8] sm:$0xff]
        %v817 = vld [vmem:[#allocation8 + $0x8] sm:$0xff]
        %v819 = vsel %vm641, %v816, 0
        %v822 = vsel %vm641, %v817, 0
        %824 = vmatprep.subr.mxu0 0.0
        %825 = vmatpush1.msra.mxu0 %v814
        %826 = vmatprep.subr.mxu0 0.0
        %827 = vmatpush1.msra.mxu0 %v815
        %828 = vmatprep.subr.mxu0 0.0
        %829 = vmatpush1.msra.mxu0 0.0
        %830 = vmatprep.subr.mxu0 0.0
        %831 = vmatpush1.msra.mxu0 0.0
        %832 = vmatprep.subr.mxu0 0.0
        %833 = vmatpush1.msra.mxu0 0.0
        %834 = vmatprep.subr.mxu0 0.0
        %835 = vmatpush1.msra.mxu0 0.0
        %836 = vmatprep.subr.mxu0 0.0
        %837 = vmatpush1.msra.mxu0 0.0
        %838 = vmatprep.subr.mxu0 0.0
        %839 = vmatpush1.msra.mxu0 0.0
        %840 = vmatprep.subr.mxu0 0.0
        %841 = vmatpush1.msra.mxu0 0.0
        %842 = vmatprep.subr.mxu0 0.0
        %843 = vmatpush1.msra.mxu0 0.0
        %844 = vmatprep.subr.mxu0 0.0
        %845 = vmatpush1.msra.mxu0 0.0
        %846 = vmatprep.subr.mxu0 0.0
        %847 = vmatpush1.msra.mxu0 0.0
        %848 = vmatprep.subr.mxu0 0.0
        %849 = vmatpush1.msra.mxu0 0.0
        %850 = vmatprep.subr.mxu0 0.0
        %851 = vmatpush1.msra.mxu0 0.0
        %852 = vmatprep.subr.mxu0 0.0
        %853 = vmatpush1.msra.mxu0 0.0
        %854 = vmatprep.subr.mxu0 0.0
        %855 = vmatpush1.msra.mxu0 0.0
        %856 = vmatprep.subr.mxu0 0.0
        %857 = vmatpush1.msra.mxu0 0.0
        %858 = vmatprep.subr.mxu0 0.0
        %859 = vmatpush1.msra.mxu0 0.0
        %860 = vmatprep.subr.mxu0 0.0
        %861 = vmatpush1.msra.mxu0 0.0
        %862 = vmatprep.subr.mxu0 0.0
        %863 = vmatpush1.msra.mxu0 0.0
        %864 = vmatprep.subr.mxu0 0.0
        %865 = vmatpush1.msra.mxu0 0.0
        %866 = vmatprep.subr.mxu0 0.0
        %867 = vmatpush1.msra.mxu0 0.0
        %868 = vmatprep.subr.mxu0 0.0
        %869 = vmatpush1.msra.mxu0 0.0
        %870 = vmatprep.subr.mxu0 0.0
        %871 = vmatpush1.msra.mxu0 0.0
        %872 = vmatprep.subr.mxu0 0.0
        %873 = vmatpush1.msra.mxu0 0.0
        %874 = vmatprep.subr.mxu0 0.0
        %875 = vmatpush1.msra.mxu0 0.0
        %876 = vmatprep.subr.mxu0 0.0
        %877 = vmatpush1.msra.mxu0 0.0
        %878 = vmatprep.subr.mxu0 0.0
        %879 = vmatpush1.msra.mxu0 0.0
        %880 = vmatprep.subr.mxu0 0.0
        %881 = vmatpush1.msra.mxu0 0.0
        %882 = vmatprep.subr.mxu0 0.0
        %883 = vmatpush1.msra.mxu0 0.0
        %884 = vmatprep.subr.mxu0 0.0
        %885 = vmatpush1.msra.mxu0 0.0
        %886 = vmatprep.subr.mxu0 0.0
        %887 = vmatpush1.msra.mxu0 0.0
        %888 = vmatprep.mubr.f32.mxu0 0.0
        %889 = vmatmul.mubr.f32.gmra.mrb[0].mxu0 %v819
        %v890 = vpop.f32.mrb[0].mxu0
        %v891 = vadd.f32 0.0, %v890
        %v892 = vpop.f32.mrb[0].mxu0
        %893 = vmatprep.mubr.f32.mxu0 0.0
        %894 = vmatmul.mubr.f32.gmra.mrb[0].mxu0 %v822
        %v895 = vpop.f32.mrb[0].mxu0
        %v896 = vadd.f32 0.0, %v895
        %v897 = vpop.f32.mrb[0].mxu0
        %898 = vdwg.mxu0
        %v899 = vld [vmem:[#allocation10] sm:$0xff]
        %v900 = vld [vmem:[#allocation10 + $0x8] sm:$0xff]
        %v902 = vsel %vm641, %v891, 0
        %v905 = vsel %vm641, %v896, 0
        %907 = vmatprep.subr.mxu0 0.0
        %908 = vmatpush1.msra.mxu0 %v899
        %909 = vmatprep.subr.mxu0 0.0
        %910 = vmatpush1.msra.mxu0 %v900
        %911 = vmatprep.subr.mxu0 0.0
        %912 = vmatpush1.msra.mxu0 0.0
        %913 = vmatprep.subr.mxu0 0.0
        %914 = vmatpush1.msra.mxu0 0.0
        %915 = vmatprep.subr.mxu0 0.0
        %916 = vmatpush1.msra.mxu0 0.0
        %917 = vmatprep.subr.mxu0 0.0
        %918 = vmatpush1.msra.mxu0 0.0
        %919 = vmatprep.subr.mxu0 0.0
        %920 = vmatpush1.msra.mxu0 0.0
        %921 = vmatprep.subr.mxu0 0.0
        %922 = vmatpush1.msra.mxu0 0.0
        %923 = vmatprep.subr.mxu0 0.0
        %924 = vmatpush1.msra.mxu0 0.0
        %925 = vmatprep.subr.mxu0 0.0
        %926 = vmatpush1.msra.mxu0 0.0
        %927 = vmatprep.subr.mxu0 0.0
        %928 = vmatpush1.msra.mxu0 0.0
        %929 = vmatprep.subr.mxu0 0.0
        %930 = vmatpush1.msra.mxu0 0.0
        %931 = vmatprep.subr.mxu0 0.0
        %932 = vmatpush1.msra.mxu0 0.0
        %933 = vmatprep.subr.mxu0 0.0
        %934 = vmatpush1.msra.mxu0 0.0
        %935 = vmatprep.subr.mxu0 0.0
        %936 = vmatpush1.msra.mxu0 0.0
        %937 = vmatprep.subr.mxu0 0.0
        %938 = vmatpush1.msra.mxu0 0.0
        %939 = vmatprep.subr.mxu0 0.0
        %940 = vmatpush1.msra.mxu0 0.0
        %941 = vmatprep.subr.mxu0 0.0
        %942 = vmatpush1.msra.mxu0 0.0
        %943 = vmatprep.subr.mxu0 0.0
        %944 = vmatpush1.msra.mxu0 0.0
        %945 = vmatprep.subr.mxu0 0.0
        %946 = vmatpush1.msra.mxu0 0.0
        %947 = vmatprep.subr.mxu0 0.0
        %948 = vmatpush1.msra.mxu0 0.0
        %949 = vmatprep.subr.mxu0 0.0
        %950 = vmatpush1.msra.mxu0 0.0
        %951 = vmatprep.subr.mxu0 0.0
        %952 = vmatpush1.msra.mxu0 0.0
        %953 = vmatprep.subr.mxu0 0.0
        %954 = vmatpush1.msra.mxu0 0.0
        %955 = vmatprep.subr.mxu0 0.0
        %956 = vmatpush1.msra.mxu0 0.0
        %957 = vmatprep.subr.mxu0 0.0
        %958 = vmatpush1.msra.mxu0 0.0
        %959 = vmatprep.subr.mxu0 0.0
        %960 = vmatpush1.msra.mxu0 0.0
        %961 = vmatprep.subr.mxu0 0.0
        %962 = vmatpush1.msra.mxu0 0.0
        %963 = vmatprep.subr.mxu0 0.0
        %964 = vmatpush1.msra.mxu0 0.0
        %965 = vmatprep.subr.mxu0 0.0
        %966 = vmatpush1.msra.mxu0 0.0
        %967 = vmatprep.subr.mxu0 0.0
        %968 = vmatpush1.msra.mxu0 0.0
        %969 = vmatprep.subr.mxu0 0.0
        %970 = vmatpush1.msra.mxu0 0.0
        %971 = vmatprep.mubr.f32.mxu0 0.0
        %972 = vmatmul.mubr.f32.gmra.mrb[0].mxu0 %v902
        %v973 = vpop.f32.mrb[0].mxu0
        %v974 = vadd.f32 128.0, %v973
        %v975 = vpop.f32.mrb[0].mxu0
        %976 = vmatprep.mubr.f32.mxu0 0.0
        %977 = vmatmul.mubr.f32.gmra.mrb[0].mxu0 %v905
        %v978 = vpop.f32.mrb[0].mxu0
        %v979 = vadd.f32 128.0, %v978
        %v980 = vpop.f32.mrb[0].mxu0
        %981 = vdwg.mxu0
        %v982 = vld [vmem:[#allocation11] sm:$0xff]
        %v983 = vsub.f32 %v623, 128.0
        %v984 = vsub.f32 %v624, 128.0
        %v986 = vsel %vm641, %v982, 0
        %988 = vmatprep.subr.mxu0 0.0
        %989 = vmatpush1.msra.mxu0 %v983
        %990 = vmatprep.subr.mxu0 0.0
        %991 = vmatpush1.msra.mxu0 %v984
        %992 = vmatprep.subr.mxu0 0.0
        %993 = vmatpush1.msra.mxu0 0.0
        %994 = vmatprep.subr.mxu0 0.0
        %995 = vmatpush1.msra.mxu0 0.0
        %996 = vmatprep.subr.mxu0 0.0
        %997 = vmatpush1.msra.mxu0 0.0
        %998 = vmatprep.subr.mxu0 0.0
        %999 = vmatpush1.msra.mxu0 0.0
        %1000 = vmatprep.subr.mxu0 0.0
        %1001 = vmatpush1.msra.mxu0 0.0
        %1002 = vmatprep.subr.mxu0 0.0
        %1003 = vmatpush1.msra.mxu0 0.0
        %1004 = vmatprep.subr.mxu0 0.0
        %1005 = vmatpush1.msra.mxu0 0.0
        %1006 = vmatprep.subr.mxu0 0.0
        %1007 = vmatpush1.msra.mxu0 0.0
        %1008 = vmatprep.subr.mxu0 0.0
        %1009 = vmatpush1.msra.mxu0 0.0
        %1010 = vmatprep.subr.mxu0 0.0
        %1011 = vmatpush1.msra.mxu0 0.0
        %1012 = vmatprep.subr.mxu0 0.0
        %1013 = vmatpush1.msra.mxu0 0.0
        %1014 = vmatprep.subr.mxu0 0.0
        %1015 = vmatpush1.msra.mxu0 0.0
        %1016 = vmatprep.subr.mxu0 0.0
        %1017 = vmatpush1.msra.mxu0 0.0
        %1018 = vmatprep.subr.mxu0 0.0
        %1019 = vmatpush1.msra.mxu0 0.0
        %1020 = vmatprep.subr.mxu0 0.0
        %1021 = vmatpush1.msra.mxu0 0.0
        %1022 = vmatprep.subr.mxu0 0.0
        %1023 = vmatpush1.msra.mxu0 0.0
        %1024 = vmatprep.subr.mxu0 0.0
        %1025 = vmatpush1.msra.mxu0 0.0
        %1026 = vmatprep.subr.mxu0 0.0
        %1027 = vmatpush1.msra.mxu0 0.0
        %1028 = vmatprep.subr.mxu0 0.0
        %1029 = vmatpush1.msra.mxu0 0.0
        %1030 = vmatprep.subr.mxu0 0.0
        %1031 = vmatpush1.msra.mxu0 0.0
        %1032 = vmatprep.subr.mxu0 0.0
        %1033 = vmatpush1.msra.mxu0 0.0
        %1034 = vmatprep.subr.mxu0 0.0
        %1035 = vmatpush1.msra.mxu0 0.0
        %1036 = vmatprep.subr.mxu0 0.0
        %1037 = vmatpush1.msra.mxu0 0.0
        %1038 = vmatprep.subr.mxu0 0.0
        %1039 = vmatpush1.msra.mxu0 0.0
        %1040 = vmatprep.subr.mxu0 0.0
        %1041 = vmatpush1.msra.mxu0 0.0
        %1042 = vmatprep.subr.mxu0 0.0
        %1043 = vmatpush1.msra.mxu0 0.0
        %1044 = vmatprep.subr.mxu0 0.0
        %1045 = vmatpush1.msra.mxu0 0.0
        %1046 = vmatprep.subr.mxu0 0.0
        %1047 = vmatpush1.msra.mxu0 0.0
        %1048 = vmatprep.subr.mxu0 0.0
        %1049 = vmatpush1.msra.mxu0 0.0
        %1050 = vmatprep.subr.mxu0 0.0
        %1051 = vmatpush1.msra.mxu0 0.0
        %1052 = vmatprep.mubr.f32.mxu0 0.0
        %1053 = vmatmul.mubr.f32.gmra.mrb[0].mxu0 %v986
        %v1054 = vpop.f32.mrb[0].mxu0
        %v1055 = vadd.f32 0.0, %v1054
        %v1056 = vpop.f32.mrb[0].mxu0
        %1057 = vdwg.mxu0
        %v1058 = vld [vmem:[#allocation13] sm:$0xff]
        %v1059 = vld [vmem:[#allocation13 + $0x8] sm:$0xff]
        %v1061 = vsel %vm641, %v1055, 0
        %1063 = vmatprep.subr.mxu0 0.0
        %1064 = vmatpush1.msra.mxu0 %v1058
        %1065 = vmatprep.subr.mxu0 0.0
        %1066 = vmatpush1.msra.mxu0 %v1059
        %1067 = vmatprep.subr.mxu0 0.0
        %1068 = vmatpush1.msra.mxu0 0.0
        %1069 = vmatprep.subr.mxu0 0.0
        %1070 = vmatpush1.msra.mxu0 0.0
        %1071 = vmatprep.subr.mxu0 0.0
        %1072 = vmatpush1.msra.mxu0 0.0
        %1073 = vmatprep.subr.mxu0 0.0
        %1074 = vmatpush1.msra.mxu0 0.0
        %1075 = vmatprep.subr.mxu0 0.0
        %1076 = vmatpush1.msra.mxu0 0.0
        %1077 = vmatprep.subr.mxu0 0.0
        %1078 = vmatpush1.msra.mxu0 0.0
        %1079 = vmatprep.subr.mxu0 0.0
        %1080 = vmatpush1.msra.mxu0 0.0
        %1081 = vmatprep.subr.mxu0 0.0
        %1082 = vmatpush1.msra.mxu0 0.0
        %1083 = vmatprep.subr.mxu0 0.0
        %1084 = vmatpush1.msra.mxu0 0.0
        %1085 = vmatprep.subr.mxu0 0.0
        %1086 = vmatpush1.msra.mxu0 0.0
        %1087 = vmatprep.subr.mxu0 0.0
        %1088 = vmatpush1.msra.mxu0 0.0
        %1089 = vmatprep.subr.mxu0 0.0
        %1090 = vmatpush1.msra.mxu0 0.0
        %1091 = vmatprep.subr.mxu0 0.0
        %1092 = vmatpush1.msra.mxu0 0.0
        %1093 = vmatprep.subr.mxu0 0.0
        %1094 = vmatpush1.msra.mxu0 0.0
        %1095 = vmatprep.subr.mxu0 0.0
        %1096 = vmatpush1.msra.mxu0 0.0
        %1097 = vmatprep.subr.mxu0 0.0
        %1098 = vmatpush1.msra.mxu0 0.0
        %1099 = vmatprep.subr.mxu0 0.0
        %1100 = vmatpush1.msra.mxu0 0.0
        %1101 = vmatprep.subr.mxu0 0.0
        %1102 = vmatpush1.msra.mxu0 0.0
        %1103 = vmatprep.subr.mxu0 0.0
        %1104 = vmatpush1.msra.mxu0 0.0
        %1105 = vmatprep.subr.mxu0 0.0
        %1106 = vmatpush1.msra.mxu0 0.0
        %1107 = vmatprep.subr.mxu0 0.0
        %1108 = vmatpush1.msra.mxu0 0.0
        %1109 = vmatprep.subr.mxu0 0.0
        %1110 = vmatpush1.msra.mxu0 0.0
        %1111 = vmatprep.subr.mxu0 0.0
        %1112 = vmatpush1.msra.mxu0 0.0
        %1113 = vmatprep.subr.mxu0 0.0
        %1114 = vmatpush1.msra.mxu0 0.0
        %1115 = vmatprep.subr.mxu0 0.0
        %1116 = vmatpush1.msra.mxu0 0.0
        %1117 = vmatprep.subr.mxu0 0.0
        %1118 = vmatpush1.msra.mxu0 0.0
        %1119 = vmatprep.subr.mxu0 0.0
        %1120 = vmatpush1.msra.mxu0 0.0
        %1121 = vmatprep.subr.mxu0 0.0
        %1122 = vmatpush1.msra.mxu0 0.0
        %1123 = vmatprep.subr.mxu0 0.0
        %1124 = vmatpush1.msra.mxu0 0.0
        %1125 = vmatprep.subr.mxu0 0.0
        %1126 = vmatpush1.msra.mxu0 0.0
        %1127 = vmatprep.mubr.f32.mxu0 0.0
        %1128 = vmatmul.mubr.f32.gmra.mrb[0].mxu0 %v1061
        %v1129 = vpop.f32.mrb[0].mxu0
        %v1130 = vadd.f32 0.0, %v1129
        %v1131 = vpop.f32.mrb[0].mxu0
        %1132 = vdwg.mxu0
        %v1133 = vld [vmem:[%s11] sm:$0xff]
        %v1134 = vmul.f32 %v1130, %v1133
        %v1135 = vround.ne.pseudo %v1134
        %v1136 = vld [vmem:[%s12] sm:$0xff]
        %v1137 = vmul.f32 %v1135, %v1136
        %v1138 = vld [vmem:[#allocation14] sm:$0xff]
        %v1139 = vld [vmem:[#allocation14 + $0x8] sm:$0xff]
        %vm1140 = vcmask 64512
        %v1142 = vsel %vm1140, %v1138, 0
        %v1145 = vsel %vm1140, %v1139, 0
        %1147 = vmatprep.subr.mxu0 0.0
        %1148 = vmatpush1.msra.mxu0 %v1137
        %1149 = vmatprep.subr.mxu0 0.0
        %1150 = vmatpush1.msra.mxu0 0.0
        %1151 = vmatprep.subr.mxu0 0.0
        %1152 = vmatpush1.msra.mxu0 0.0
        %1153 = vmatprep.subr.mxu0 0.0
        %1154 = vmatpush1.msra.mxu0 0.0
        %1155 = vmatprep.subr.mxu0 0.0
        %1156 = vmatpush1.msra.mxu0 0.0
        %1157 = vmatprep.subr.mxu0 0.0
        %1158 = vmatpush1.msra.mxu0 0.0
        %1159 = vmatprep.subr.mxu0 0.0
        %1160 = vmatpush1.msra.mxu0 0.0
        %1161 = vmatprep.subr.mxu0 0.0
        %1162 = vmatpush1.msra.mxu0 0.0
        %1163 = vmatprep.subr.mxu0 0.0
        %1164 = vmatpush1.msra.mxu0 0.0
        %1165 = vmatprep.subr.mxu0 0.0
        %1166 = vmatpush1.msra.mxu0 0.0
        %1167 = vmatprep.subr.mxu0 0.0
        %1168 = vmatpush1.msra.mxu0 0.0
        %1169 = vmatprep.subr.mxu0 0.0
        %1170 = vmatpush1.msra.mxu0 0.0
        %1171 = vmatprep.subr.mxu0 0.0
        %1172 = vmatpush1.msra.mxu0 0.0
        %1173 = vmatprep.subr.mxu0 0.0
        %1174 = vmatpush1.msra.mxu0 0.0
        %1175 = vmatprep.subr.mxu0 0.0
        %1176 = vmatpush1.msra.mxu0 0.0
        %1177 = vmatprep.subr.mxu0 0.0
        %1178 = vmatpush1.msra.mxu0 0.0
        %1179 = vmatprep.subr.mxu0 0.0
        %1180 = vmatpush1.msra.mxu0 0.0
        %1181 = vmatprep.subr.mxu0 0.0
        %1182 = vmatpush1.msra.mxu0 0.0
        %1183 = vmatprep.subr.mxu0 0.0
        %1184 = vmatpush1.msra.mxu0 0.0
        %1185 = vmatprep.subr.mxu0 0.0
        %1186 = vmatpush1.msra.mxu0 0.0
        %1187 = vmatprep.subr.mxu0 0.0
        %1188 = vmatpush1.msra.mxu0 0.0
        %1189 = vmatprep.subr.mxu0 0.0
        %1190 = vmatpush1.msra.mxu0 0.0
        %1191 = vmatprep.subr.mxu0 0.0
        %1192 = vmatpush1.msra.mxu0 0.0
        %1193 = vmatprep.subr.mxu0 0.0
        %1194 = vmatpush1.msra.mxu0 0.0
        %1195 = vmatprep.subr.mxu0 0.0
        %1196 = vmatpush1.msra.mxu0 0.0
        %1197 = vmatprep.subr.mxu0 0.0
        %1198 = vmatpush1.msra.mxu0 0.0
        %1199 = vmatprep.subr.mxu0 0.0
        %1200 = vmatpush1.msra.mxu0 0.0
        %1201 = vmatprep.subr.mxu0 0.0
        %1202 = vmatpush1.msra.mxu0 0.0
        %1203 = vmatprep.subr.mxu0 0.0
        %1204 = vmatpush1.msra.mxu0 0.0
        %1205 = vmatprep.subr.mxu0 0.0
        %1206 = vmatpush1.msra.mxu0 0.0
        %1207 = vmatprep.subr.mxu0 0.0
        %1208 = vmatpush1.msra.mxu0 0.0
        %1209 = vmatprep.subr.mxu0 0.0
        %1210 = vmatpush1.msra.mxu0 0.0
        %1211 = vmatprep.mubr.f32.mxu0 0.0
        %1212 = vmatmul.mubr.f32.gmra.mrb[0].mxu0 %v1142
        %v1213 = vpop.f32.mrb[0].mxu0
        %v1214 = vadd.f32 0.0, %v1213
        %v1215 = vpop.f32.mrb[0].mxu0
        %1216 = vmatprep.mubr.f32.mxu0 0.0
        %1217 = vmatmul.mubr.f32.gmra.mrb[0].mxu0 %v1145
        %v1218 = vpop.f32.mrb[0].mxu0
        %v1219 = vadd.f32 0.0, %v1218
        %v1220 = vpop.f32.mrb[0].mxu0
        %1221 = vdwg.mxu0
        %v1222 = vld [vmem:[#allocation16] sm:$0xff]
        %v1224 = vsel %vm1140, %v1214, 0
        %v1227 = vsel %vm1140, %v1219, 0
        %1229 = vmatprep.subr.mxu0 0.0
        %1230 = vmatpush1.msra.mxu0 %v1222
        %1231 = vmatprep.subr.mxu0 0.0
        %1232 = vmatpush1.msra.mxu0 0.0
        %1233 = vmatprep.subr.mxu0 0.0
        %1234 = vmatpush1.msra.mxu0 0.0
        %1235 = vmatprep.subr.mxu0 0.0
        %1236 = vmatpush1.msra.mxu0 0.0
        %1237 = vmatprep.subr.mxu0 0.0
        %1238 = vmatpush1.msra.mxu0 0.0
        %1239 = vmatprep.subr.mxu0 0.0
        %1240 = vmatpush1.msra.mxu0 0.0
        %1241 = vmatprep.subr.mxu0 0.0
        %1242 = vmatpush1.msra.mxu0 0.0
        %1243 = vmatprep.subr.mxu0 0.0
        %1244 = vmatpush1.msra.mxu0 0.0
        %1245 = vmatprep.subr.mxu0 0.0
        %1246 = vmatpush1.msra.mxu0 0.0
        %1247 = vmatprep.subr.mxu0 0.0
        %1248 = vmatpush1.msra.mxu0 0.0
        %1249 = vmatprep.subr.mxu0 0.0
        %1250 = vmatpush1.msra.mxu0 0.0
        %1251 = vmatprep.subr.mxu0 0.0
        %1252 = vmatpush1.msra.mxu0 0.0
        %1253 = vmatprep.subr.mxu0 0.0
        %1254 = vmatpush1.msra.mxu0 0.0
        %1255 = vmatprep.subr.mxu0 0.0
        %1256 = vmatpush1.msra.mxu0 0.0
        %1257 = vmatprep.subr.mxu0 0.0
        %1258 = vmatpush1.msra.mxu0 0.0
        %1259 = vmatprep.subr.mxu0 0.0
        %1260 = vmatpush1.msra.mxu0 0.0
        %1261 = vmatprep.subr.mxu0 0.0
        %1262 = vmatpush1.msra.mxu0 0.0
        %1263 = vmatprep.subr.mxu0 0.0
        %1264 = vmatpush1.msra.mxu0 0.0
        %1265 = vmatprep.subr.mxu0 0.0
        %1266 = vmatpush1.msra.mxu0 0.0
        %1267 = vmatprep.subr.mxu0 0.0
        %1268 = vmatpush1.msra.mxu0 0.0
        %1269 = vmatprep.subr.mxu0 0.0
        %1270 = vmatpush1.msra.mxu0 0.0
        %1271 = vmatprep.subr.mxu0 0.0
        %1272 = vmatpush1.msra.mxu0 0.0
        %1273 = vmatprep.subr.mxu0 0.0
        %1274 = vmatpush1.msra.mxu0 0.0
        %1275 = vmatprep.subr.mxu0 0.0
        %1276 = vmatpush1.msra.mxu0 0.0
        %1277 = vmatprep.subr.mxu0 0.0
        %1278 = vmatpush1.msra.mxu0 0.0
        %1279 = vmatprep.subr.mxu0 0.0
        %1280 = vmatpush1.msra.mxu0 0.0
        %1281 = vmatprep.subr.mxu0 0.0
        %1282 = vmatpush1.msra.mxu0 0.0
        %1283 = vmatprep.subr.mxu0 0.0
        %1284 = vmatpush1.msra.mxu0 0.0
        %1285 = vmatprep.subr.mxu0 0.0
        %1286 = vmatpush1.msra.mxu0 0.0
        %1287 = vmatprep.subr.mxu0 0.0
        %1288 = vmatpush1.msra.mxu0 0.0
        %1289 = vmatprep.subr.mxu0 0.0
        %1290 = vmatpush1.msra.mxu0 0.0
        %1291 = vmatprep.subr.mxu0 0.0
        %1292 = vmatpush1.msra.mxu0 0.0
        %1293 = vmatprep.mubr.f32.mxu0 0.0
        %1294 = vmatmul.mubr.f32.gmra.mrb[0].mxu0 %v1224
        %v1295 = vpop.f32.mrb[0].mxu0
        %v1296 = vadd.f32 128.0, %v1295
        %v1297 = vpop.f32.mrb[0].mxu0
        %1298 = vmatprep.mubr.f32.mxu0 0.0
        %1299 = vmatmul.mubr.f32.gmra.mrb[0].mxu0 %v1227
        %v1300 = vpop.f32.mrb[0].mxu0
        %v1301 = vadd.f32 128.0, %v1300
        %v1302 = vpop.f32.mrb[0].mxu0
        %1303 = vdwg.mxu0
        %v1304 = vsub.f32 %v1296, 128.0
        %v1305 = vsub.f32 %v1301, 128.0
        %v1306 = vsub.f32 %v635, 128.0
        %v1307 = vsub.f32 %v636, 128.0
        %1308 = vmatprep.subr.mxu0 0.0
        %1309 = vmatpush1.msra.mxu0 %v1306
        %1310 = vmatprep.subr.mxu0 0.0
        %1311 = vmatpush1.msra.mxu0 %v1307
        %1312 = vmatprep.subr.mxu0 0.0
        %1313 = vmatpush1.msra.mxu0 0.0
        %1314 = vmatprep.subr.mxu0 0.0
        %1315 = vmatpush1.msra.mxu0 0.0
        %1316 = vmatprep.subr.mxu0 0.0
        %1317 = vmatpush1.msra.mxu0 0.0
        %1318 = vmatprep.subr.mxu0 0.0
        %1319 = vmatpush1.msra.mxu0 0.0
        %1320 = vmatprep.subr.mxu0 0.0
        %1321 = vmatpush1.msra.mxu0 0.0
        %1322 = vmatprep.subr.mxu0 0.0
        %1323 = vmatpush1.msra.mxu0 0.0
        %1324 = vmatprep.subr.mxu0 0.0
        %1325 = vmatpush1.msra.mxu0 0.0
        %1326 = vmatprep.subr.mxu0 0.0
        %1327 = vmatpush1.msra.mxu0 0.0
        %1328 = vmatprep.subr.mxu0 0.0
        %1329 = vmatpush1.msra.mxu0 0.0
        %1330 = vmatprep.subr.mxu0 0.0
        %1331 = vmatpush1.msra.mxu0 0.0
        %1332 = vmatprep.subr.mxu0 0.0
        %1333 = vmatpush1.msra.mxu0 0.0
        %1334 = vmatprep.subr.mxu0 0.0
        %1335 = vmatpush1.msra.mxu0 0.0
        %1336 = vmatprep.subr.mxu0 0.0
        %1337 = vmatpush1.msra.mxu0 0.0
        %1338 = vmatprep.subr.mxu0 0.0
        %1339 = vmatpush1.msra.mxu0 0.0
        %1340 = vmatprep.subr.mxu0 0.0
        %1341 = vmatpush1.msra.mxu0 0.0
        %1342 = vmatprep.subr.mxu0 0.0
        %1343 = vmatpush1.msra.mxu0 0.0
        %1344 = vmatprep.subr.mxu0 0.0
        %1345 = vmatpush1.msra.mxu0 0.0
        %1346 = vmatprep.subr.mxu0 0.0
        %1347 = vmatpush1.msra.mxu0 0.0
        %1348 = vmatprep.subr.mxu0 0.0
        %1349 = vmatpush1.msra.mxu0 0.0
        %1350 = vmatprep.subr.mxu0 0.0
        %1351 = vmatpush1.msra.mxu0 0.0
        %1352 = vmatprep.subr.mxu0 0.0
        %1353 = vmatpush1.msra.mxu0 0.0
        %1354 = vmatprep.subr.mxu0 0.0
        %1355 = vmatpush1.msra.mxu0 0.0
        %1356 = vmatprep.subr.mxu0 0.0
        %1357 = vmatpush1.msra.mxu0 0.0
        %1358 = vmatprep.subr.mxu0 0.0
        %1359 = vmatpush1.msra.mxu0 0.0
        %1360 = vmatprep.subr.mxu0 0.0
        %1361 = vmatpush1.msra.mxu0 0.0
        %1362 = vmatprep.subr.mxu0 0.0
        %1363 = vmatpush1.msra.mxu0 0.0
        %1364 = vmatprep.subr.mxu0 0.0
        %1365 = vmatpush1.msra.mxu0 0.0
        %1366 = vmatprep.subr.mxu0 0.0
        %1367 = vmatpush1.msra.mxu0 0.0
        %1368 = vmatprep.subr.mxu0 0.0
        %1369 = vmatpush1.msra.mxu0 0.0
        %1370 = vmatprep.subr.mxu0 0.0
        %1371 = vmatpush1.msra.mxu0 0.0
        %1372 = vmatprep.mubr.f32.mxu0 0.0
        %1373 = vmatmul.mubr.f32.gmra.mrb[0].mxu0 %v986
        %v1374 = vpop.f32.mrb[0].mxu0
        %v1375 = vadd.f32 0.0, %v1374
        %v1376 = vpop.f32.mrb[0].mxu0
        %1377 = vdwg.mxu0
        %v1379 = vsel %vm641, %v1375, 0
        %1381 = vmatprep.subr.mxu0 0.0
        %1382 = vmatpush1.msra.mxu0 %v1058
        %1383 = vmatprep.subr.mxu0 0.0
        %1384 = vmatpush1.msra.mxu0 %v1059
        %1385 = vmatprep.subr.mxu0 0.0
        %1386 = vmatpush1.msra.mxu0 0.0
        %1387 = vmatprep.subr.mxu0 0.0
        %1388 = vmatpush1.msra.mxu0 0.0
        %1389 = vmatprep.subr.mxu0 0.0
        %1390 = vmatpush1.msra.mxu0 0.0
        %1391 = vmatprep.subr.mxu0 0.0
        %1392 = vmatpush1.msra.mxu0 0.0
        %1393 = vmatprep.subr.mxu0 0.0
        %1394 = vmatpush1.msra.mxu0 0.0
        %1395 = vmatprep.subr.mxu0 0.0
        %1396 = vmatpush1.msra.mxu0 0.0
        %1397 = vmatprep.subr.mxu0 0.0
        %1398 = vmatpush1.msra.mxu0 0.0
        %1399 = vmatprep.subr.mxu0 0.0
        %1400 = vmatpush1.msra.mxu0 0.0
        %1401 = vmatprep.subr.mxu0 0.0
        %1402 = vmatpush1.msra.mxu0 0.0
        %1403 = vmatprep.subr.mxu0 0.0
        %1404 = vmatpush1.msra.mxu0 0.0
        %1405 = vmatprep.subr.mxu0 0.0
        %1406 = vmatpush1.msra.mxu0 0.0
        %1407 = vmatprep.subr.mxu0 0.0
        %1408 = vmatpush1.msra.mxu0 0.0
        %1409 = vmatprep.subr.mxu0 0.0
        %1410 = vmatpush1.msra.mxu0 0.0
        %1411 = vmatprep.subr.mxu0 0.0
        %1412 = vmatpush1.msra.mxu0 0.0
        %1413 = vmatprep.subr.mxu0 0.0
        %1414 = vmatpush1.msra.mxu0 0.0
        %1415 = vmatprep.subr.mxu0 0.0
        %1416 = vmatpush1.msra.mxu0 0.0
        %1417 = vmatprep.subr.mxu0 0.0
        %1418 = vmatpush1.msra.mxu0 0.0
        %1419 = vmatprep.subr.mxu0 0.0
        %1420 = vmatpush1.msra.mxu0 0.0
        %1421 = vmatprep.subr.mxu0 0.0
        %1422 = vmatpush1.msra.mxu0 0.0
        %1423 = vmatprep.subr.mxu0 0.0
        %1424 = vmatpush1.msra.mxu0 0.0
        %1425 = vmatprep.subr.mxu0 0.0
        %1426 = vmatpush1.msra.mxu0 0.0
        %1427 = vmatprep.subr.mxu0 0.0
        %1428 = vmatpush1.msra.mxu0 0.0
        %1429 = vmatprep.subr.mxu0 0.0
        %1430 = vmatpush1.msra.mxu0 0.0
        %1431 = vmatprep.subr.mxu0 0.0
        %1432 = vmatpush1.msra.mxu0 0.0
        %1433 = vmatprep.subr.mxu0 0.0
        %1434 = vmatpush1.msra.mxu0 0.0
        %1435 = vmatprep.subr.mxu0 0.0
        %1436 = vmatpush1.msra.mxu0 0.0
        %1437 = vmatprep.subr.mxu0 0.0
        %1438 = vmatpush1.msra.mxu0 0.0
        %1439 = vmatprep.subr.mxu0 0.0
        %1440 = vmatpush1.msra.mxu0 0.0
        %1441 = vmatprep.subr.mxu0 0.0
        %1442 = vmatpush1.msra.mxu0 0.0
        %1443 = vmatprep.subr.mxu0 0.0
        %1444 = vmatpush1.msra.mxu0 0.0
        %1445 = vmatprep.mubr.f32.mxu0 0.0
        %1446 = vmatmul.mubr.f32.gmra.mrb[0].mxu0 %v1379
        %v1447 = vpop.f32.mrb[0].mxu0
        %v1448 = vadd.f32 0.0, %v1447
        %v1449 = vpop.f32.mrb[0].mxu0
        %1450 = vdwg.mxu0
        %v1451 = vmul.f32 %v1448, %v1133
        %v1452 = vround.ne.pseudo %v1451
        %v1453 = vmul.f32 %v1452, %v1136
        %1454 = vmatprep.subr.mxu0 0.0
        %1455 = vmatpush1.msra.mxu0 %v1453
        %1456 = vmatprep.subr.mxu0 0.0
        %1457 = vmatpush1.msra.mxu0 0.0
        %1458 = vmatprep.subr.mxu0 0.0
        %1459 = vmatpush1.msra.mxu0 0.0
        %1460 = vmatprep.subr.mxu0 0.0
        %1461 = vmatpush1.msra.mxu0 0.0
        %1462 = vmatprep.subr.mxu0 0.0
        %1463 = vmatpush1.msra.mxu0 0.0
        %1464 = vmatprep.subr.mxu0 0.0
        %1465 = vmatpush1.msra.mxu0 0.0
        %1466 = vmatprep.subr.mxu0 0.0
        %1467 = vmatpush1.msra.mxu0 0.0
        %1468 = vmatprep.subr.mxu0 0.0
        %1469 = vmatpush1.msra.mxu0 0.0
        %1470 = vmatprep.subr.mxu0 0.0
        %1471 = vmatpush1.msra.mxu0 0.0
        %1472 = vmatprep.subr.mxu0 0.0
        %1473 = vmatpush1.msra.mxu0 0.0
        %1474 = vmatprep.subr.mxu0 0.0
        %1475 = vmatpush1.msra.mxu0 0.0
        %1476 = vmatprep.subr.mxu0 0.0
        %1477 = vmatpush1.msra.mxu0 0.0
        %1478 = vmatprep.subr.mxu0 0.0
        %1479 = vmatpush1.msra.mxu0 0.0
        %1480 = vmatprep.subr.mxu0 0.0
        %1481 = vmatpush1.msra.mxu0 0.0
        %1482 = vmatprep.subr.mxu0 0.0
        %1483 = vmatpush1.msra.mxu0 0.0
        %1484 = vmatprep.subr.mxu0 0.0
        %1485 = vmatpush1.msra.mxu0 0.0
        %1486 = vmatprep.subr.mxu0 0.0
        %1487 = vmatpush1.msra.mxu0 0.0
        %1488 = vmatprep.subr.mxu0 0.0
        %1489 = vmatpush1.msra.mxu0 0.0
        %1490 = vmatprep.subr.mxu0 0.0
        %1491 = vmatpush1.msra.mxu0 0.0
        %1492 = vmatprep.subr.mxu0 0.0
        %1493 = vmatpush1.msra.mxu0 0.0
        %1494 = vmatprep.subr.mxu0 0.0
        %1495 = vmatpush1.msra.mxu0 0.0
        %1496 = vmatprep.subr.mxu0 0.0
        %1497 = vmatpush1.msra.mxu0 0.0
        %1498 = vmatprep.subr.mxu0 0.0
        %1499 = vmatpush1.msra.mxu0 0.0
        %1500 = vmatprep.subr.mxu0 0.0
        %1501 = vmatpush1.msra.mxu0 0.0
        %1502 = vmatprep.subr.mxu0 0.0
        %1503 = vmatpush1.msra.mxu0 0.0
        %1504 = vmatprep.subr.mxu0 0.0
        %1505 = vmatpush1.msra.mxu0 0.0
        %1506 = vmatprep.subr.mxu0 0.0
        %1507 = vmatpush1.msra.mxu0 0.0
        %1508 = vmatprep.subr.mxu0 0.0
        %1509 = vmatpush1.msra.mxu0 0.0
        %1510 = vmatprep.subr.mxu0 0.0
        %1511 = vmatpush1.msra.mxu0 0.0
        %1512 = vmatprep.subr.mxu0 0.0
        %1513 = vmatpush1.msra.mxu0 0.0
        %1514 = vmatprep.subr.mxu0 0.0
        %1515 = vmatpush1.msra.mxu0 0.0
        %1516 = vmatprep.subr.mxu0 0.0
        %1517 = vmatpush1.msra.mxu0 0.0
        %1518 = vmatprep.mubr.f32.mxu0 0.0
        %1519 = vmatmul.mubr.f32.gmra.mrb[0].mxu0 %v1142
        %v1520 = vpop.f32.mrb[0].mxu0
        %v1521 = vadd.f32 0.0, %v1520
        %v1522 = vpop.f32.mrb[0].mxu0
        %1523 = vmatprep.mubr.f32.mxu0 0.0
        %1524 = vmatmul.mubr.f32.gmra.mrb[0].mxu0 %v1145
        %v1525 = vpop.f32.mrb[0].mxu0
        %v1526 = vadd.f32 0.0, %v1525
        %v1527 = vpop.f32.mrb[0].mxu0
        %1528 = vdwg.mxu0
        %v1530 = vsel %vm1140, %v1521, 0
        %v1533 = vsel %vm1140, %v1526, 0
        %1535 = vmatprep.subr.mxu0 0.0
        %1536 = vmatpush1.msra.mxu0 %v1222
        %1537 = vmatprep.subr.mxu0 0.0
        %1538 = vmatpush1.msra.mxu0 0.0
        %1539 = vmatprep.subr.mxu0 0.0
        %1540 = vmatpush1.msra.mxu0 0.0
        %1541 = vmatprep.subr.mxu0 0.0
        %1542 = vmatpush1.msra.mxu0 0.0
        %1543 = vmatprep.subr.mxu0 0.0
        %1544 = vmatpush1.msra.mxu0 0.0
        %1545 = vmatprep.subr.mxu0 0.0
        %1546 = vmatpush1.msra.mxu0 0.0
        %1547 = vmatprep.subr.mxu0 0.0
        %1548 = vmatpush1.msra.mxu0 0.0
        %1549 = vmatprep.subr.mxu0 0.0
        %1550 = vmatpush1.msra.mxu0 0.0
        %1551 = vmatprep.subr.mxu0 0.0
        %1552 = vmatpush1.msra.mxu0 0.0
        %1553 = vmatprep.subr.mxu0 0.0
        %1554 = vmatpush1.msra.mxu0 0.0
        %1555 = vmatprep.subr.mxu0 0.0
        %1556 = vmatpush1.msra.mxu0 0.0
        %1557 = vmatprep.subr.mxu0 0.0
        %1558 = vmatpush1.msra.mxu0 0.0
        %1559 = vmatprep.subr.mxu0 0.0
        %1560 = vmatpush1.msra.mxu0 0.0
        %1561 = vmatprep.subr.mxu0 0.0
        %1562 = vmatpush1.msra.mxu0 0.0
        %1563 = vmatprep.subr.mxu0 0.0
        %1564 = vmatpush1.msra.mxu0 0.0
        %1565 = vmatprep.subr.mxu0 0.0
        %1566 = vmatpush1.msra.mxu0 0.0
        %1567 = vmatprep.subr.mxu0 0.0
        %1568 = vmatpush1.msra.mxu0 0.0
        %1569 = vmatprep.subr.mxu0 0.0
        %1570 = vmatpush1.msra.mxu0 0.0
        %1571 = vmatprep.subr.mxu0 0.0
        %1572 = vmatpush1.msra.mxu0 0.0
        %1573 = vmatprep.subr.mxu0 0.0
        %1574 = vmatpush1.msra.mxu0 0.0
        %1575 = vmatprep.subr.mxu0 0.0
        %1576 = vmatpush1.msra.mxu0 0.0
        %1577 = vmatprep.subr.mxu0 0.0
        %1578 = vmatpush1.msra.mxu0 0.0
        %1579 = vmatprep.subr.mxu0 0.0
        %1580 = vmatpush1.msra.mxu0 0.0
        %1581 = vmatprep.subr.mxu0 0.0
        %1582 = vmatpush1.msra.mxu0 0.0
        %1583 = vmatprep.subr.mxu0 0.0
        %1584 = vmatpush1.msra.mxu0 0.0
        %1585 = vmatprep.subr.mxu0 0.0
        %1586 = vmatpush1.msra.mxu0 0.0
        %1587 = vmatprep.subr.mxu0 0.0
        %1588 = vmatpush1.msra.mxu0 0.0
        %1589 = vmatprep.subr.mxu0 0.0
        %1590 = vmatpush1.msra.mxu0 0.0
        %1591 = vmatprep.subr.mxu0 0.0
        %1592 = vmatpush1.msra.mxu0 0.0
        %1593 = vmatprep.subr.mxu0 0.0
        %1594 = vmatpush1.msra.mxu0 0.0
        %1595 = vmatprep.subr.mxu0 0.0
        %1596 = vmatpush1.msra.mxu0 0.0
        %1597 = vmatprep.subr.mxu0 0.0
        %1598 = vmatpush1.msra.mxu0 0.0
        %1599 = vmatprep.mubr.f32.mxu0 0.0
        %1600 = vmatmul.mubr.f32.gmra.mrb[0].mxu0 %v1530
        %v1601 = vpop.f32.mrb[0].mxu0
        %v1602 = vadd.f32 128.0, %v1601
        %v1603 = vpop.f32.mrb[0].mxu0
        %1604 = vmatprep.mubr.f32.mxu0 0.0
        %1605 = vmatmul.mubr.f32.gmra.mrb[0].mxu0 %v1533
        %v1606 = vpop.f32.mrb[0].mxu0
        %v1607 = vadd.f32 128.0, %v1606
        %v1608 = vpop.f32.mrb[0].mxu0
        %1609 = vdwg.mxu0
        %v1610 = vsub.f32 %v1602, 128.0
        %v1611 = vsub.f32 %v1607, 128.0
        %v1612 = vmul.f32 %v1610, 1.402
        %v1613 = vmul.f32 %v1611, 1.402
        %v1614 = vadd.f32 %v974, %v1612
        %v1615 = vadd.f32 %v979, %v1613
        %v1616 = vmul.f32 %v1304, 0.344136
        %v1617 = vmul.f32 %v1305, 0.344136
        %v1618 = vsub.f32 %v974, %v1616
        %v1619 = vsub.f32 %v979, %v1617
        %v1620 = vmul.f32 %v1610, 0.714136
        %v1621 = vmul.f32 %v1611, 0.714136
        %v1622 = vsub.f32 %v1618, %v1620
        %v1623 = vsub.f32 %v1619, %v1621
        %v1624 = vmul.f32 %v1304, 1.772
        %v1625 = vmul.f32 %v1305, 1.772
        %v1626 = vadd.f32 %v974, %v1624
        %v1627 = vadd.f32 %v979, %v1625
        %v1628 = vmax.f32 %v1614, 0.0
        %v1629 = vmax.f32 %v1615, 0.0
        %v1630 = vmin.f32 %v1628, 255.0
        %v1631 = vmin.f32 %v1629, 255.0
        %v1632 = vmul.f32 %v1630, 0.003921569
        %v1633 = vmul.f32 %v1631, 0.003921569
        %1634 = vst.msk [vmem:[%s586] sm:$0xff] %vm641, %v1632
        %1635 = vst.msk [vmem:[%s586 + $0x8] sm:$0xff] %vm641, %v1633
        %v1636 = vmax.f32 %v1622, 0.0
        %v1637 = vmax.f32 %v1623, 0.0
        %v1638 = vmin.f32 %v1636, 255.0
        %v1639 = vmin.f32 %v1637, 255.0
        %v1640 = vmul.f32 %v1638, 0.003921569
        %v1641 = vmul.f32 %v1639, 0.003921569
        %s1642 = scalar_lea.vmem %s586, 16 [#allocation19]
        %1643 = vst.msk [vmem:[%s1642] sm:$0xff] %vm641, %v1640
        %1644 = vst.msk [vmem:[%s1642 + $0x8] sm:$0xff] %vm641, %v1641
        %v1645 = vmax.f32 %v1626, 0.0
        %v1646 = vmax.f32 %v1627, 0.0
        %v1647 = vmin.f32 %v1645, 255.0
        %v1648 = vmin.f32 %v1646, 255.0
        %v1649 = vmul.f32 %v1647, 0.003921569
        %v1650 = vmul.f32 %v1648, 0.003921569
        %s1651 = scalar_lea.vmem %s586, 32 [#allocation19]
        %1652 = vst.msk [vmem:[%s1651] sm:$0xff] %vm641, %v1649
        %1653 = vst.msk [vmem:[%s1651 + $0x8] sm:$0xff] %vm641, %v1650
        %s1654 = sand.u32 %s321, 1
        %s1655 = scalar_lea.sflag [#allocation4], %s1654
        %s1656 = sand.u32 %s321, 1
        %s1657 = smul.addr %s1656, 48
        %s1658 = scalar_lea.vmem [#allocation19], %s1657
        // Predicated region
        $region113: #{_lambda_.1} parent=71 // pred_check
          %p1659 = pneg %p331
        $region114: #{_lambda_.1} parent=71 // pred_check_branch
          %1661 = sbr.rel (%p1659) target = $region116
        $region115: #{_lambda_.1} parent=71 // pred_region
          %s1662 = smul.u32 3, %s35
          %s1664 = ssub.s32 768, 768
          %1665 = vsyncadd %s1655, %s1664
          %s1666 = smul.addr %s1662, 2
          %s1667 = smul.addr %s1666, 128
          %s1668 = scalar_lea.hbm %s13, %s1667
          %s1669 = sshll.u32 %s1658, 4
          %s1670 = int_to_ptr.vmem [resolvable:$true] %s1669
          %1675 = dma.vmem_to_hbm [thread:$0]  %s1670, 768, %s1668, %s1655, 128, 128, 8
        $region116: #{_lambda_.1} parent=71 // pred_fallthru
          _
      $region72: #{_lambda_.1} parent=5 // pred_fallthru
        _
      %p1676 = scmp.le.s32.totalorder 2, %s30
      // Predicated region
      $region117: #{_lambda_.1} parent=5 // pred_check
        %p1677 = pneg %p1676
      $region118: #{_lambda_.1} parent=5 // pred_check_branch
        %1679 = sbr.rel (%p1677) target = $region120
      $region119: #{_lambda_.1} parent=5 // pred_region
        %s1680 = ssub.s32 %s30, 2
        // Predicated region
        $region121: #{_lambda_.1} parent=119 // pred_check
          %p1681 = pneg %p337
        $region122: #{_lambda_.1} parent=119 // pred_check_branch
          %1683 = sbr.rel (%p1681) target = $region124
        $region123: #{_lambda_.1} parent=119 // pred_region
          %s1684 = sand.u32 %s322, 1
          %s1685 = scalar_lea.sflag [#allocation4], %s1684
          %s1686 = sand.u32 %s322, 1
          %s1687 = smul.addr %s1686, 48
          %s1688 = scalar_lea.vmem [#allocation19], %s1687
          %1689 = dma.done %s1685, 768
        $region124: #{_lambda_.1} parent=119 // pred_fallthru
          _
      $region120: #{_lambda_.1} parent=5 // pred_fallthru
        _
    $region6: #{_lambda_.1} parent=1 // loop_footer
      %s34 = sadd.s32 1, %s30
    $region7: #{_lambda_.1} parent=1 // loop_footer_branch
      %29 = sbr.rel target = $region3
    $region8: #{_lambda_.1} parent=1 // loop_exit
      _
    %1690 = vsyncpa [#allocation3], 1
    %s1691 = scalar_lea.sflag [#allocation3], 1
    %1692 = vsyncpa %s1691, 1
    %1693 = vsyncpa [#allocation6], 1
    %1694 = vsyncpa [#allocation9], 1
    %1695 = vsyncpa [#allocation12], 1
    %1696 = vsyncpa [#allocation15], 1
    %1697 = vsyncpa [#allocation18], 1
    %1698 = vsyncpa [#allocation4], 1
    %s1699 = scalar_lea.sflag [#allocation4], 1
    %1700 = vsyncpa %s1699, 1

</llo_original>
